<compile_context>
chip_gen: v7x
topology: tpu7x:2x2x1
jax: 0.10.0
libtpu: 0.0.40
codegen_flags: <defaults>
</compile_context>

<pallas_src>
import functools

import jax
import jax.numpy as jnp
from jax import lax
from jax.experimental import pallas as pl
from jax.experimental.pallas import tpu as pltpu

KERNEL_SIZES = (9, 19, 39)
K_MAX = KERNEL_SIZES[-1]          # 39
NUM_FILTERS = 32
BOTTLENECK_CHANNELS = 32
MAX_PAD = K_MAX // 2              # 19
BN_EPS = 1e-5


# --------------------------------------------------------------------------
# Kernel 1: (bottleneck) + fused conv1/2/3 + maxpool + 1x1 conv
#           + per-tile BatchNorm partial statistics
# --------------------------------------------------------------------------
def _inception_conv_kernel(*refs, tile_l, L, use_bottleneck, mask_tail):
    if use_bottleneck:
        x_ref, wb_ref, w_all_ref, w4_ref, out_ref, stats_ref = refs
    else:
        x_ref, w_all_ref, w4_ref, out_ref, stats_ref = refs
        wb_ref = None

    F = NUM_FILTERS
    x = x_ref[0, 0]                                   # (tile_l + 2*MAX_PAD, C_in) f32

    # ---- bottleneck (skipped when it's nn.Identity) ------------------------
    if use_bottleneck:
        xb = jnp.dot(x, wb_ref[...], preferred_element_type=jnp.float32)
    else:
        xb = x
    xb = xb.astype(jnp.bfloat16)                      # bf16 feeds the MXU

    # ---- fused conv1/conv2/conv3: one im2col + one MXU matmul --------------
    # NOTE: the 39 shifted views start at unaligned sublane offsets; grouping
    # taps into aligned chunks / pltpu.roll is a possible further micro-opt.
    cols = [xb[t:t + tile_l, :] for t in range(K_MAX)]
    xcol = jnp.concatenate(cols, axis=-1)             # (tile_l, 39*c_eff) bf16
    conv123 = jnp.dot(xcol, w_all_ref[...],
                      preferred_element_type=jnp.float32)    # (tile_l, 3F) f32

    # ---- MaxPool1d(k=3, s=1, p=1, -inf padding) on ORIGINAL input + 1x1 ----
    xc = x[MAX_PAD:MAX_PAD + tile_l, :]
    xl = x[MAX_PAD - 1:MAX_PAD - 1 + tile_l, :]
    xr = x[MAX_PAD + 1:MAX_PAD + 1 + tile_l, :]
    gpos = (pl.program_id(1) * tile_l
            + lax.broadcasted_iota(jnp.int32, (tile_l, 1), 0))   # global position
    neg_inf = jnp.float32(-jnp.inf)
    xl = jnp.where(gpos == 0, neg_inf, xl)            # PyTorch pads pool with -inf
    xr = jnp.where(gpos == L - 1, neg_inf, xr)
    pool = jnp.maximum(jnp.maximum(xl, xc), xr)       # (tile_l, C_in)
    conv4 = jnp.dot(pool.astype(jnp.bfloat16), w4_ref[...],
                    preferred_element_type=jnp.float32)          # (tile_l, F)

    # ---- direct lane-slice stores (no 4-way concat) ------------------------
    out_ref[0, :, 0:3 * F] = conv123
    out_ref[0, :, 3 * F:4 * F] = conv4

    # ---- per-tile BN partial statistics (sum, sum of squares) --------------
    if mask_tail:
        valid = (gpos < L).astype(jnp.float32)        # mask padded tail rows
        c123 = conv123 * valid
        c4 = conv4 * valid
    else:
        c123, c4 = conv123, conv4
    stats_ref[0, 0, 0:1, 0:3 * F] = jnp.sum(c123, axis=0, keepdims=True)
    stats_ref[0, 0, 0:1, 3 * F:4 * F] = jnp.sum(c4, axis=0, keepdims=True)
    stats_ref[0, 0, 1:2, 0:3 * F] = jnp.sum(c123 * conv123, axis=0, keepdims=True)
    stats_ref[0, 0, 1:2, 3 * F:4 * F] = jnp.sum(c4 * conv4, axis=0, keepdims=True)


# --------------------------------------------------------------------------
# Kernel 2: tiled normalize (precomputed scale/shift) + ReLU
# --------------------------------------------------------------------------
def _bn_relu_kernel(x_ref, scale_ref, shift_ref, out_ref):
    y = x_ref[...] * scale_ref[...] + shift_ref[...]
    out_ref[...] = jnp.maximum(y, 0.0)


# --------------------------------------------------------------------------
# Parameter construction (shapes follow the nn.Module __init__)
# --------------------------------------------------------------------------
def init_params(key, in_channels):
    use_bottleneck = in_channels > BOTTLENECK_CHANNELS
    c_eff = BOTTLENECK_CHANNELS if use_bottleneck else in_channels
    ks = jax.random.split(key, 5)
    params = {}
    if use_bottleneck:
        params["wb"] = 0.1 * jax.random.normal(
            ks[0], (BOTTLENECK_CHANNELS, in_channels, 1), jnp.float32)
    else:
        params["wb"] = None
    params["w1"] = 0.1 * jax.random.normal(
        ks[1], (NUM_FILTERS, c_eff, KERNEL_SIZES[0]), jnp.float32)
    params["w2"] = 0.1 * jax.random.normal(
        ks[2], (NUM_FILTERS, c_eff, KERNEL_SIZES[1]), jnp.float32)
    params["w3"] = 0.1 * jax.random.normal(
        ks[3], (NUM_FILTERS, c_eff, KERNEL_SIZES[2]), jnp.float32)
    params["w4"] = 0.1 * jax.random.normal(
        ks[4], (NUM_FILTERS, in_channels, 1), jnp.float32)
    params["gamma"] = jnp.ones((4 * NUM_FILTERS,), jnp.float32)   # BN init
    params["beta"] = jnp.zeros((4 * NUM_FILTERS,), jnp.float32)
    return params


# --------------------------------------------------------------------------
# Pallas wrapper (input / output in PyTorch NCL layout)
# --------------------------------------------------------------------------
def inception_module_pallas(x_ncl, params, *, tile_l_target=512):
    N, C_in, L = x_ncl.shape
    F = NUM_FILTERS
    C_out = 4 * F

    use_bottleneck = params["wb"] is not None
    c_eff = BOTTLENECK_CHANNELS if use_bottleneck else C_in

    # ----- weight preparation (once, outside the kernels) -------------------
    def conv_w_to_fused(w):                 # (F, c_eff, k) -> (K_MAX*c_eff, F)
        k = w.shape[-1]
        p = (K_MAX - k) // 2
        wp = jnp.pad(w, ((0, 0), (0, 0), (p, p)))       # zero-pad taps to 39
        return jnp.transpose(wp, (2, 1, 0)).reshape(K_MAX * w.shape[1], F)

    w_all = jnp.concatenate(
        [conv_w_to_fused(params["w1"]),
         conv_w_to_fused(params["w2"]),
         conv_w_to_fused(params["w3"])], axis=-1).astype(jnp.bfloat16)  # (39*c_eff, 96)
    w4 = jnp.transpose(params["w4"][:, :, 0], (1, 0)).astype(jnp.bfloat16)  # (C_in, F)
    if use_bottleneck:
        wb = jnp.transpose(params["wb"][:, :, 0], (1, 0))               # (C_in, 32) f32

    # ----- L tiling with halo (bounded VMEM per grid step) ------------------
    tile_l_target = max(8, (tile_l_target // 8) * 8)
    tile_l = min(tile_l_target, max(8, -(-L // 8) * 8))
    num_tiles = -(-L // tile_l)
    L_pad = num_tiles * tile_l
    halo_len = tile_l + 2 * MAX_PAD

    x_nlc = jnp.transpose(x_ncl, (0, 2, 1)).astype(jnp.float32)         # (N, L, C_in)
    x_padded = jnp.pad(x_nlc, ((0, 0), (MAX_PAD, MAX_PAD + L_pad - L), (0, 0)))
    # Materialize overlapping halo tiles so non-overlapping BlockSpecs work.
    gather = (jnp.arange(num_tiles)[:, None] * tile_l
              + jnp.arange(halo_len)[None, :])                          # (T, halo_len)
    x_tiles = x_padded[:, gather, :]                                    # (N, T, halo_len, C_in)

    kernel = functools.partial(
        _inception_conv_kernel, tile_l=tile_l, L=L,
        use_bottleneck=use_bottleneck, mask_tail=(L_pad != L))

    in_specs = [pl.BlockSpec((1, 1, halo_len, C_in), lambda n, t: (n, t, 0, 0))]
    operands = [x_tiles]
    if use_bottleneck:
        in_specs.append(pl.BlockSpec((C_in, c_eff), lambda n, t: (0, 0)))
        operands.append(wb)
    in_specs += [
        pl.BlockSpec((K_MAX * c_eff, 3 * F), lambda n, t: (0, 0)),
        pl.BlockSpec((C_in, F), lambda n, t: (0, 0)),
    ]
    operands += [w_all, w4]

    conv_out, stats = pl.pallas_call(
        kernel,
        out_shape=(jax.ShapeDtypeStruct((N, L_pad, C_out), jnp.float32),
                   jax.ShapeDtypeStruct((N, num_tiles, 2, C_out), jnp.float32)),
        grid_spec=pltpu.PrefetchScalarGridSpec(
            num_scalar_prefetch=0,
            grid=(N, num_tiles),
            in_specs=in_specs,
            out_specs=(pl.BlockSpec((1, tile_l, C_out), lambda n, t: (n, t, 0)),
                       pl.BlockSpec((1, 1, 2, C_out), lambda n, t: (n, t, 0, 0))),
        ),
        compiler_params=pltpu.CompilerParams(
            dimension_semantics=("parallel", "parallel")),
    )(*operands)

    # ----- tiny BN statistics reduction + scale/shift (outside kernels) -----
    tot = jnp.sum(stats, axis=(0, 1))                   # (2, C_out)
    count = jnp.float32(N * L)
    mean = tot[0] / count
    var = tot[1] / count - mean * mean                  # biased (training-mode) variance
    inv = lax.rsqrt(var + BN_EPS)
    scale = (params["gamma"] * inv).reshape(1, 1, C_out)
    shift = (params["beta"] - mean * params["gamma"] * inv).reshape(1, 1, C_out)

    bn_out = pl.pallas_call(
        _bn_relu_kernel,
        out_shape=jax.ShapeDtypeStruct((N, L_pad, C_out), jnp.float32),
        grid_spec=pltpu.PrefetchScalarGridSpec(
            num_scalar_prefetch=0,
            grid=(N, num_tiles),
            in_specs=[
                pl.BlockSpec((1, tile_l, C_out), lambda n, t: (n, t, 0)),
                pl.BlockSpec((1, 1, C_out), lambda n, t: (0, 0, 0)),
                pl.BlockSpec((1, 1, C_out), lambda n, t: (0, 0, 0)),
            ],
            out_specs=pl.BlockSpec((1, tile_l, C_out), lambda n, t: (n, t, 0)),
        ),
        compiler_params=pltpu.CompilerParams(
            dimension_semantics=("parallel", "parallel")),
    )(conv_out, scale, shift)

    # NLC -> NCL, drop padded tail.
    return jnp.transpose(bn_out[:, :L, :], (0, 2, 1))


# --------------------------------------------------------------------------
# Pure-JAX reference (f32 ground truth for the correctness check)
# --------------------------------------------------------------------------
def inception_module_ref(x_ncl, params):
    def conv1d(inp, w, pad):
        return lax.conv_general_dilated(
            inp, w, window_strides=(1,), padding=[(pad, pad)],
            dimension_numbers=("NCH", "OIH", "NCH"))

    x = x_ncl.astype(jnp.float32)
    xb = conv1d(x, params["wb"], 0) if params["wb"] is not None else x
    c1 = conv1d(xb, params["w1"], KERNEL_SIZES[0] // 2)
    c2 = conv1d(xb, params["w2"], KERNEL_SIZES[1] // 2)
    c3 = conv1d(xb, params["w3"], KERNEL_SIZES[2] // 2)
    pool = lax.reduce_window(x, -jnp.inf, lax.max,
                             (1, 1, 3), (1, 1, 1),
                             [(0, 0), (0, 0), (1, 1)])
    c4 = conv1d(pool, params["w4"], 0)
    y = jnp.concatenate([c1, c2, c3, c4], axis=1)                  # (N, 4F, L)
    mean = jnp.mean(y, axis=(0, 2), keepdims=True)
    var = jnp.mean((y - mean) ** 2, axis=(0, 2), keepdims=True)
    y = (y - mean) * lax.rsqrt(var + BN_EPS)
    y = y * params["gamma"][None, :, None] + params["beta"][None, :, None]
    return jnp.maximum(y, 0.0)


if __name__ == "__main__":
    key = jax.random.PRNGKey(0)
    k1, k2, k3, k4 = jax.random.split(key, 4)

    # Tolerance is relaxed vs pure-f32 because the big MXU matmuls use bf16
    # inputs (f32 accumulation), per the perf review for v6e/v7x.
    ATOL = RTOL = 3e-2

    # Case 1: identity bottleneck (C_in <= 32), multi-tile L with remainder.
    N, C_IN, L = 2, 4, 200
    x = jax.random.normal(k1, (N, C_IN, L), jnp.float32)
    params = init_params(k2, C_IN)
    out = jax.block_until_ready(
        inception_module_pallas(x, params, tile_l_target=64))
    ref = inception_module_ref(x, params)
    assert out.shape == (N, 4 * NUM_FILTERS, L), out.shape
    assert jnp.allclose(out, ref, atol=ATOL, rtol=RTOL), (
        float(jnp.max(jnp.abs(out - ref))))

    # Case 2: real bottleneck (C_in > 32), single tile.
    N2, C_IN2, L2 = 2, 48, 64
    x2 = jax.random.normal(k3, (N2, C_IN2, L2), jnp.float32)
    params2 = init_params(k4, C_IN2)
    out2 = jax.block_until_ready(inception_module_pallas(x2, params2))
    ref2 = inception_module_ref(x2, params2)
    assert out2.shape == (N2, 4 * NUM_FILTERS, L2), out2.shape
    assert jnp.allclose(out2, ref2, atol=ATOL, rtol=RTOL), (
        float(jnp.max(jnp.abs(out2 - ref2))))

    print("KERNEL_OK")
</pallas_src>

<mosaic_0001>
module attributes {stable_mosaic.version = 11 : i64} {
  func.func @_inception_conv_kernel(%arg0: i32, %arg1: i32, %arg2: memref<1x1x102x4xf32, #tpu.memory_space<vmem>>, %arg3: memref<156x96xbf16, #tpu.memory_space<vmem>>, %arg4: memref<4x32xbf16, #tpu.memory_space<vmem>>, %arg5: memref<1x64x128xf32, #tpu.memory_space<vmem>>, %arg6: memref<1x1x2x128xf32, #tpu.memory_space<vmem>>) attributes {dimension_semantics = [#tpu.dimension_semantics<parallel>, #tpu.dimension_semantics<parallel>], iteration_bounds = array<i64: 2, 4>, scalar_prefetch = 0 : i64, scratch_operands = 0 : i64, tpu.core_type = #tpu.core_type<tc>, window_params = [{transform_indices = @transform_0, window_bounds = array<i64: 1, 1, 102, 4>}, {pipeline_mode = #tpu.pipeline_mode<synchronous>, transform_indices = @transform_1, window_bounds = array<i64: 156, 96>}, {pipeline_mode = #tpu.pipeline_mode<synchronous>, transform_indices = @transform_2, window_bounds = array<i64: 4, 32>}, {transform_indices = @transform_3, window_bounds = array<i64: 1, 64, 128>}, {transform_indices = @transform_4, window_bounds = array<i64: 1, 1, 2, 128>}]} {
    %c0 = arith.constant 0 : index
    %c0_0 = arith.constant 0 : index
    %c0_1 = arith.constant 0 : index
    %c0_2 = arith.constant 0 : index
    %0 = vector.load %arg2[%c0, %c0_0, %c0_1, %c0_2] : memref<1x1x102x4xf32, #tpu.memory_space<vmem>>, vector<1x1x102x4xf32>
    %1 = vector.shape_cast %0 : vector<1x1x102x4xf32> to vector<102x4xf32>
    %2 = arith.truncf %1 : vector<102x4xf32> to vector<102x4xbf16>
    %3 = vector.extract_strided_slice %2 {offsets = [0, 0], sizes = [64, 4], strides = [1, 1]} : vector<102x4xbf16> to vector<64x4xbf16>
    %4 = vector.extract_strided_slice %2 {offsets = [1, 0], sizes = [64, 4], strides = [1, 1]} : vector<102x4xbf16> to vector<64x4xbf16>
    %5 = vector.extract_strided_slice %2 {offsets = [2, 0], sizes = [64, 4], strides = [1, 1]} : vector<102x4xbf16> to vector<64x4xbf16>
    %6 = vector.extract_strided_slice %2 {offsets = [3, 0], sizes = [64, 4], strides = [1, 1]} : vector<102x4xbf16> to vector<64x4xbf16>
    %7 = vector.extract_strided_slice %2 {offsets = [4, 0], sizes = [64, 4], strides = [1, 1]} : vector<102x4xbf16> to vector<64x4xbf16>
    %8 = vector.extract_strided_slice %2 {offsets = [5, 0], sizes = [64, 4], strides = [1, 1]} : vector<102x4xbf16> to vector<64x4xbf16>
    %9 = vector.extract_strided_slice %2 {offsets = [6, 0], sizes = [64, 4], strides = [1, 1]} : vector<102x4xbf16> to vector<64x4xbf16>
    %10 = vector.extract_strided_slice %2 {offsets = [7, 0], sizes = [64, 4], strides = [1, 1]} : vector<102x4xbf16> to vector<64x4xbf16>
    %11 = vector.extract_strided_slice %2 {offsets = [8, 0], sizes = [64, 4], strides = [1, 1]} : vector<102x4xbf16> to vector<64x4xbf16>
    %12 = vector.extract_strided_slice %2 {offsets = [9, 0], sizes = [64, 4], strides = [1, 1]} : vector<102x4xbf16> to vector<64x4xbf16>
    %13 = vector.extract_strided_slice %2 {offsets = [10, 0], sizes = [64, 4], strides = [1, 1]} : vector<102x4xbf16> to vector<64x4xbf16>
    %14 = vector.extract_strided_slice %2 {offsets = [11, 0], sizes = [64, 4], strides = [1, 1]} : vector<102x4xbf16> to vector<64x4xbf16>
    %15 = vector.extract_strided_slice %2 {offsets = [12, 0], sizes = [64, 4], strides = [1, 1]} : vector<102x4xbf16> to vector<64x4xbf16>
    %16 = vector.extract_strided_slice %2 {offsets = [13, 0], sizes = [64, 4], strides = [1, 1]} : vector<102x4xbf16> to vector<64x4xbf16>
    %17 = vector.extract_strided_slice %2 {offsets = [14, 0], sizes = [64, 4], strides = [1, 1]} : vector<102x4xbf16> to vector<64x4xbf16>
    %18 = vector.extract_strided_slice %2 {offsets = [15, 0], sizes = [64, 4], strides = [1, 1]} : vector<102x4xbf16> to vector<64x4xbf16>
    %19 = vector.extract_strided_slice %2 {offsets = [16, 0], sizes = [64, 4], strides = [1, 1]} : vector<102x4xbf16> to vector<64x4xbf16>
    %20 = vector.extract_strided_slice %2 {offsets = [17, 0], sizes = [64, 4], strides = [1, 1]} : vector<102x4xbf16> to vector<64x4xbf16>
    %21 = vector.extract_strided_slice %2 {offsets = [18, 0], sizes = [64, 4], strides = [1, 1]} : vector<102x4xbf16> to vector<64x4xbf16>
    %22 = vector.extract_strided_slice %2 {offsets = [19, 0], sizes = [64, 4], strides = [1, 1]} : vector<102x4xbf16> to vector<64x4xbf16>
    %23 = vector.extract_strided_slice %2 {offsets = [20, 0], sizes = [64, 4], strides = [1, 1]} : vector<102x4xbf16> to vector<64x4xbf16>
    %24 = vector.extract_strided_slice %2 {offsets = [21, 0], sizes = [64, 4], strides = [1, 1]} : vector<102x4xbf16> to vector<64x4xbf16>
    %25 = vector.extract_strided_slice %2 {offsets = [22, 0], sizes = [64, 4], strides = [1, 1]} : vector<102x4xbf16> to vector<64x4xbf16>
    %26 = vector.extract_strided_slice %2 {offsets = [23, 0], sizes = [64, 4], strides = [1, 1]} : vector<102x4xbf16> to vector<64x4xbf16>
    %27 = vector.extract_strided_slice %2 {offsets = [24, 0], sizes = [64, 4], strides = [1, 1]} : vector<102x4xbf16> to vector<64x4xbf16>
    %28 = vector.extract_strided_slice %2 {offsets = [25, 0], sizes = [64, 4], strides = [1, 1]} : vector<102x4xbf16> to vector<64x4xbf16>
    %29 = vector.extract_strided_slice %2 {offsets = [26, 0], sizes = [64, 4], strides = [1, 1]} : vector<102x4xbf16> to vector<64x4xbf16>
    %30 = vector.extract_strided_slice %2 {offsets = [27, 0], sizes = [64, 4], strides = [1, 1]} : vector<102x4xbf16> to vector<64x4xbf16>
    %31 = vector.extract_strided_slice %2 {offsets = [28, 0], sizes = [64, 4], strides = [1, 1]} : vector<102x4xbf16> to vector<64x4xbf16>
    %32 = vector.extract_strided_slice %2 {offsets = [29, 0], sizes = [64, 4], strides = [1, 1]} : vector<102x4xbf16> to vector<64x4xbf16>
    %33 = vector.extract_strided_slice %2 {offsets = [30, 0], sizes = [64, 4], strides = [1, 1]} : vector<102x4xbf16> to vector<64x4xbf16>
    %34 = vector.extract_strided_slice %2 {offsets = [31, 0], sizes = [64, 4], strides = [1, 1]} : vector<102x4xbf16> to vector<64x4xbf16>
    %35 = vector.extract_strided_slice %2 {offsets = [32, 0], sizes = [64, 4], strides = [1, 1]} : vector<102x4xbf16> to vector<64x4xbf16>
    %36 = vector.extract_strided_slice %2 {offsets = [33, 0], sizes = [64, 4], strides = [1, 1]} : vector<102x4xbf16> to vector<64x4xbf16>
    %37 = vector.extract_strided_slice %2 {offsets = [34, 0], sizes = [64, 4], strides = [1, 1]} : vector<102x4xbf16> to vector<64x4xbf16>
    %38 = vector.extract_strided_slice %2 {offsets = [35, 0], sizes = [64, 4], strides = [1, 1]} : vector<102x4xbf16> to vector<64x4xbf16>
    %39 = vector.extract_strided_slice %2 {offsets = [36, 0], sizes = [64, 4], strides = [1, 1]} : vector<102x4xbf16> to vector<64x4xbf16>
    %40 = vector.extract_strided_slice %2 {offsets = [37, 0], sizes = [64, 4], strides = [1, 1]} : vector<102x4xbf16> to vector<64x4xbf16>
    %41 = vector.extract_strided_slice %2 {offsets = [38, 0], sizes = [64, 4], strides = [1, 1]} : vector<102x4xbf16> to vector<64x4xbf16>
    %42 = tpu.concatenate %3, %4, %5, %6, %7, %8, %9, %10, %11, %12, %13, %14, %15, %16, %17, %18 in 1 : vector<64x4xbf16>, vector<64x4xbf16>, vector<64x4xbf16>, vector<64x4xbf16>, vector<64x4xbf16>, vector<64x4xbf16>, vector<64x4xbf16>, vector<64x4xbf16>, vector<64x4xbf16>, vector<64x4xbf16>, vector<64x4xbf16>, vector<64x4xbf16>, vector<64x4xbf16>, vector<64x4xbf16>, vector<64x4xbf16>, vector<64x4xbf16> -> vector<64x64xbf16>
    %43 = tpu.concatenate %19, %20, %21, %22, %23, %24, %25, %26, %27, %28, %29, %30, %31, %32, %33, %34 in 1 : vector<64x4xbf16>, vector<64x4xbf16>, vector<64x4xbf16>, vector<64x4xbf16>, vector<64x4xbf16>, vector<64x4xbf16>, vector<64x4xbf16>, vector<64x4xbf16>, vector<64x4xbf16>, vector<64x4xbf16>, vector<64x4xbf16>, vector<64x4xbf16>, vector<64x4xbf16>, vector<64x4xbf16>, vector<64x4xbf16>, vector<64x4xbf16> -> vector<64x64xbf16>
    %44 = tpu.concatenate %35, %36, %37, %38, %39, %40, %41 in 1 : vector<64x4xbf16>, vector<64x4xbf16>, vector<64x4xbf16>, vector<64x4xbf16>, vector<64x4xbf16>, vector<64x4xbf16>, vector<64x4xbf16> -> vector<64x28xbf16>
    %45 = tpu.concatenate %42, %43, %44 in 1 : vector<64x64xbf16>, vector<64x64xbf16>, vector<64x28xbf16> -> vector<64x156xbf16>
    %c0_3 = arith.constant 0 : index
    %c0_4 = arith.constant 0 : index
    %46 = vector.load %arg3[%c0_3, %c0_4] : memref<156x96xbf16, #tpu.memory_space<vmem>>, vector<156x96xbf16>
    %cst = arith.constant dense<0.000000e+00> : vector<64x96xf32>
    %47 = tpu.matmul %45, %46, %cst {dimension_numbers = #tpu.dot_dimension_numbers<[1], [0], [0], [1], [0, 0, 1, 1], [], []>} : vector<64x156xbf16>, vector<156x96xbf16>, vector<64x96xf32> -> vector<64x96xf32>
    %48 = vector.extract_strided_slice %1 {offsets = [19, 0], sizes = [64, 4], strides = [1, 1]} : vector<102x4xf32> to vector<64x4xf32>
    %49 = vector.extract_strided_slice %1 {offsets = [18, 0], sizes = [64, 4], strides = [1, 1]} : vector<102x4xf32> to vector<64x4xf32>
    %50 = vector.extract_strided_slice %1 {offsets = [20, 0], sizes = [64, 4], strides = [1, 1]} : vector<102x4xf32> to vector<64x4xf32>
    %c64_i32 = arith.constant 64 : i32
    %51 = arith.muli %arg1, %c64_i32 : i32
    %52 = tpu.iota {dimensions = array<i32: 0>} : vector<64x1xi32>
    %53 = vector.broadcast %51 : i32 to vector<64x1xi32>
    %54 = arith.addi %53, %52 : vector<64x1xi32>
    %c0_i32 = arith.constant 0 : i32
    %55 = vector.broadcast %c0_i32 : i32 to vector<64x1xi32>
    %56 = arith.cmpi eq, %54, %55 : vector<64x1xi32>
    %cst_5 = arith.constant 0xFF800000 : f32
    %57 = vector.shape_cast %56 : vector<64x1xi1> to vector<64x1xi1>
    %58 = vector.broadcast %57 : vector<64x1xi1> to vector<64x4xi1>
    %59 = vector.broadcast %cst_5 : f32 to vector<64x4xf32>
    %60 = arith.select %58, %59, %49 : vector<64x4xi1>, vector<64x4xf32>
    %c199_i32 = arith.constant 199 : i32
    %61 = vector.broadcast %c199_i32 : i32 to vector<64x1xi32>
    %62 = arith.cmpi eq, %54, %61 : vector<64x1xi32>
    %cst_6 = arith.constant 0xFF800000 : f32
    %63 = vector.shape_cast %62 : vector<64x1xi1> to vector<64x1xi1>
    %64 = vector.broadcast %63 : vector<64x1xi1> to vector<64x4xi1>
    %65 = vector.broadcast %cst_6 : f32 to vector<64x4xf32>
    %66 = arith.select %64, %65, %50 : vector<64x4xi1>, vector<64x4xf32>
    %67 = arith.maximumf %60, %48 : vector<64x4xf32>
    %68 = arith.maximumf %67, %66 : vector<64x4xf32>
    %69 = arith.truncf %68 : vector<64x4xf32> to vector<64x4xbf16>
    %c0_7 = arith.constant 0 : index
    %c0_8 = arith.constant 0 : index
    %70 = vector.load %arg4[%c0_7, %c0_8] : memref<4x32xbf16, #tpu.memory_space<vmem>>, vector<4x32xbf16>
    %cst_9 = arith.constant dense<0.000000e+00> : vector<64x32xf32>
    %71 = tpu.matmul %69, %70, %cst_9 {dimension_numbers = #tpu.dot_dimension_numbers<[1], [0], [0], [1], [0, 0, 1, 1], [], []>} : vector<64x4xbf16>, vector<4x32xbf16>, vector<64x32xf32> -> vector<64x32xf32>
    %c0_10 = arith.constant 0 : index
    %c0_11 = arith.constant 0 : index
    %c0_12 = arith.constant 0 : index
    %72 = vector.load %arg5[%c0_10, %c0_11, %c0_12] : memref<1x64x128xf32, #tpu.memory_space<vmem>>, vector<1x64x96xf32>
    %73 = vector.shape_cast %72 : vector<1x64x96xf32> to vector<64x96xf32>
    %74 = vector.shape_cast %47 : vector<64x96xf32> to vector<1x64x96xf32>
    tpu.vector_store %arg5[%c0_10, %c0_11, %c0_12], %74 {strides = array<i32>} : memref<1x64x128xf32, #tpu.memory_space<vmem>>, vector<1x64x96xf32>,
    %c0_13 = arith.constant 0 : index
    %c0_14 = arith.constant 0 : index
    %c96 = arith.constant 96 : index
    %75 = vector.load %arg5[%c0_13, %c0_14, %c96] : memref<1x64x128xf32, #tpu.memory_space<vmem>>, vector<1x64x32xf32>
    %76 = vector.shape_cast %75 : vector<1x64x32xf32> to vector<64x32xf32>
    %77 = vector.shape_cast %71 : vector<64x32xf32> to vector<1x64x32xf32>
    tpu.vector_store %arg5[%c0_13, %c0_14, %c96], %77 {strides = array<i32>} : memref<1x64x128xf32, #tpu.memory_space<vmem>>, vector<1x64x32xf32>,
    %c200_i32 = arith.constant 200 : i32
    %78 = vector.broadcast %c200_i32 : i32 to vector<64x1xi32>
    %79 = arith.cmpi slt, %54, %78 : vector<64x1xi32>
    %80 = arith.extui %79 : vector<64x1xi1> to vector<64x1xi32>
    %81 = arith.sitofp %80 : vector<64x1xi32> to vector<64x1xf32>
    %82 = vector.broadcast %81 : vector<64x1xf32> to vector<64x96xf32>
    %83 = arith.mulf %47, %82 : vector<64x96xf32>
    %84 = vector.broadcast %81 : vector<64x1xf32> to vector<64x32xf32>
    %85 = arith.mulf %71, %84 : vector<64x32xf32>
    %cst_15 = arith.constant dense<0.000000e+00> : vector<96xf32>
    %86 = vector.multi_reduction <add>, %83, %cst_15 [0] : vector<64x96xf32> to vector<96xf32>
    %87 = vector.shape_cast %86 : vector<96xf32> to vector<1x96xf32>
    %c0_16 = arith.constant 0 : index
    %c0_17 = arith.constant 0 : index
    %c0_18 = arith.constant 0 : index
    %c0_19 = arith.constant 0 : index
    %88 = vector.load %arg6[%c0_16, %c0_17, %c0_18, %c0_19] : memref<1x1x2x128xf32, #tpu.memory_space<vmem>>, vector<1x1x1x96xf32>
    %89 = vector.shape_cast %88 : vector<1x1x1x96xf32> to vector<1x96xf32>
    %90 = vector.shape_cast %87 : vector<1x96xf32> to vector<1x1x1x96xf32>
    tpu.vector_store %arg6[%c0_16, %c0_17, %c0_18, %c0_19], %90 {strides = array<i32>} : memref<1x1x2x128xf32, #tpu.memory_space<vmem>>, vector<1x1x1x96xf32>,
    %cst_20 = arith.constant dense<0.000000e+00> : vector<32xf32>
    %91 = vector.multi_reduction <add>, %85, %cst_20 [0] : vector<64x32xf32> to vector<32xf32>
    %92 = vector.shape_cast %91 : vector<32xf32> to vector<1x32xf32>
    %c0_21 = arith.constant 0 : index
    %c0_22 = arith.constant 0 : index
    %c0_23 = arith.constant 0 : index
    %c96_24 = arith.constant 96 : index
    %93 = vector.load %arg6[%c0_21, %c0_22, %c0_23, %c96_24] : memref<1x1x2x128xf32, #tpu.memory_space<vmem>>, vector<1x1x1x32xf32>
    %94 = vector.shape_cast %93 : vector<1x1x1x32xf32> to vector<1x32xf32>
    %95 = vector.shape_cast %92 : vector<1x32xf32> to vector<1x1x1x32xf32>
    tpu.vector_store %arg6[%c0_21, %c0_22, %c0_23, %c96_24], %95 {strides = array<i32>} : memref<1x1x2x128xf32, #tpu.memory_space<vmem>>, vector<1x1x1x32xf32>,
    %96 = arith.mulf %83, %47 : vector<64x96xf32>
    %cst_25 = arith.constant dense<0.000000e+00> : vector<96xf32>
    %97 = vector.multi_reduction <add>, %96, %cst_25 [0] : vector<64x96xf32> to vector<96xf32>
    %98 = vector.shape_cast %97 : vector<96xf32> to vector<1x96xf32>
    %c0_26 = arith.constant 0 : index
    %c0_27 = arith.constant 0 : index
    %c1 = arith.constant 1 : index
    %c0_28 = arith.constant 0 : index
    %99 = vector.load %arg6[%c0_26, %c0_27, %c1, %c0_28] : memref<1x1x2x128xf32, #tpu.memory_space<vmem>>, vector<1x1x1x96xf32>
    %100 = vector.shape_cast %99 : vector<1x1x1x96xf32> to vector<1x96xf32>
    %101 = vector.shape_cast %98 : vector<1x96xf32> to vector<1x1x1x96xf32>
    tpu.vector_store %arg6[%c0_26, %c0_27, %c1, %c0_28], %101 {strides = array<i32>} : memref<1x1x2x128xf32, #tpu.memory_space<vmem>>, vector<1x1x1x96xf32>,
    %102 = arith.mulf %85, %71 : vector<64x32xf32>
    %cst_29 = arith.constant dense<0.000000e+00> : vector<32xf32>
    %103 = vector.multi_reduction <add>, %102, %cst_29 [0] : vector<64x32xf32> to vector<32xf32>
    %104 = vector.shape_cast %103 : vector<32xf32> to vector<1x32xf32>
    %c0_30 = arith.constant 0 : index
    %c0_31 = arith.constant 0 : index
    %c1_32 = arith.constant 1 : index
    %c96_33 = arith.constant 96 : index
    %105 = vector.load %arg6[%c0_30, %c0_31, %c1_32, %c96_33] : memref<1x1x2x128xf32, #tpu.memory_space<vmem>>, vector<1x1x1x32xf32>
    %106 = vector.shape_cast %105 : vector<1x1x1x32xf32> to vector<1x32xf32>
    %107 = vector.shape_cast %104 : vector<1x32xf32> to vector<1x1x1x32xf32>
    tpu.vector_store %arg6[%c0_30, %c0_31, %c1_32, %c96_33], %107 {strides = array<i32>} : memref<1x1x2x128xf32, #tpu.memory_space<vmem>>, vector<1x1x1x32xf32>,
    return
  }
  func.func @transform_0(%arg0: i32, %arg1: i32) -> (i32, i32, i32, i32) {
    %c0_i32 = arith.constant 0 : i32
    %c0_i32_0 = arith.constant 0 : i32
    %c0_i32_1 = arith.constant 0 : i32
    return %arg0, %arg1, %c0_i32, %c0_i32_0 : i32, i32, i32, i32
  }
  func.func @transform_1(%arg0: i32, %arg1: i32) -> (i32, i32) {
    %c0_i32 = arith.constant 0 : i32
    %c0_i32_0 = arith.constant 0 : i32
    %c0_i32_1 = arith.constant 0 : i32
    return %c0_i32, %c0_i32_0 : i32, i32
  }
  func.func @transform_2(%arg0: i32, %arg1: i32) -> (i32, i32) {
    %c0_i32 = arith.constant 0 : i32
    %c0_i32_0 = arith.constant 0 : i32
    %c0_i32_1 = arith.constant 0 : i32
    return %c0_i32, %c0_i32_0 : i32, i32
  }
  func.func @transform_3(%arg0: i32, %arg1: i32) -> (i32, i32, i32) {
    %c0_i32 = arith.constant 0 : i32
    %c0_i32_0 = arith.constant 0 : i32
    return %arg0, %arg1, %c0_i32 : i32, i32, i32
  }
  func.func @transform_4(%arg0: i32, %arg1: i32) -> (i32, i32, i32, i32) {
    %c0_i32 = arith.constant 0 : i32
    %c0_i32_0 = arith.constant 0 : i32
    %c0_i32_1 = arith.constant 0 : i32
    return %arg0, %arg1, %c0_i32, %c0_i32_0 : i32, i32, i32, i32
  }
}

</mosaic_0001>

<llo_original>
// kernel: tpu_custom_call.1
$region0: #{tpu_custom_call.1}
  #allocation0 [shape = 'u32[]', space=smem, size = 0x4, offset = 0x4, fixed_abs, tag = 'smem constant byte address 0x4 - core index']
  #allocation1 [shape = 'u32[144,128]{1,0:T(1,128)}', space=vmem, size = 0x12000, scoped, tag = 'internal scratch']
  %s0 = inlined_call_operand.vmem [shape: f32[2,4,102,4], index: 0, kind: input, shape index: {}]
  %s1 = inlined_call_operand.vmem [shape: bf16[156,96], index: 1, kind: input, shape index: {}]
  %s2 = inlined_call_operand.vmem [shape: bf16[4,32], index: 2, kind: input, shape index: {}]
  %s3 = inlined_call_operand.hbm [shape: f32[2,256,128], index: 3, kind: output, shape index: {0}]
  %s4 = inlined_call_operand.hbm [shape: f32[2,4,2,128], index: 4, kind: output, shape index: {1}]
  %5 = xla_tuple %s3, %s4
  %s6 = sld [smem:[#allocation0]]
  $region53: #{tpu_custom_call.1} parent=0
    _
  %s8 = ssub.s32 1, %s6
  %s9 = scalar_select 0, %s8, %s6
  $region1: #{tpu_custom_call.1} parent=0
    #allocation2 [shape = 'u8[65536]{0}', space=vmem, size = 0x10000, scoped, tag = 'output window, operand 0']
    #allocation3 [shape = 's32[2]{0}', space=sflag, size = 0x8, scoped, tag = 'scoped memory for tpu_custom_call.1']
    #allocation4 [shape = 'u8[2048]{0}', space=vmem, size = 0x800, scoped, tag = 'output window, operand 1']
    #allocation5 [shape = 's32[2]{0}', space=sflag, size = 0x8, scoped, tag = 'scoped memory for tpu_custom_call.1']
    %10 = vsyncpa [#allocation3], 0
    %s11 = scalar_lea.sflag [#allocation3], 1
    %12 = vsyncpa %s11, 0
    %13 = vsyncpa [#allocation5], 0
    %s14 = scalar_lea.sflag [#allocation5], 1
    %15 = vsyncpa %s14, 0
    loop: start=0, step=1, limit=10
    $region2: #{tpu_custom_call.1} parent=1 // loop_pre_header
      _
    $region3: #{tpu_custom_call.1} parent=1 // loop_header
      %s17 = sphi 0, %s21
      %p18 = scmp.ge.s32.totalorder %s17, 10
      %s24 = sphi 0, %s36
      %s25 = sphi 0, %s32
      %s26 = sphi 0, %s24
      %s27 = sphi 0, %s25
      %s28 = sphi 0, %s26
      %s29 = sphi 0, %s27
      %s41 = sphi 0, %s43
      %s44 = sphi 0, %s41
      %s45 = sphi 0, %s44
      %s61 = sphi 0, %s45
      %s65 = sphi 0, %s65
      %s67 = sphi 0, %s65
      %s68 = sphi 0, %s67
      %s82 = sphi 0, %s68
      %s86 = sphi 0, %s86
      %s88 = sphi 0, %s86
      %s89 = sphi 0, %s88
      %s103 = sphi 0, %s89
      %s111 = sphi 0, %s113
      %s114 = sphi 0, %s111
      %s115 = sphi 0, %s114
      %s131 = sphi 0, %s115
      %s139 = sphi 0, %s141
      %s142 = sphi 0, %s139
      %s143 = sphi 0, %s142
      %s159 = sphi 0, %s143
    $region4: #{tpu_custom_call.1} parent=1 // loop_header_branch
      %20 = sbr.rel (%p18) target = $region8
    $region5: #{tpu_custom_call.1} parent=1 // loop_body
      %s22 = ssub.s32 %s17, 1
      %s23 = ssub.s32 %s17, 2
      %s30 = sadd.s32 1, %s25
      %p31 = scmp.ge.s32.totalorder %s30, 4
      %s32 = scalar_select %p31, 0, %s30
      %s33 = sadd.s32 1, %s24
      %s34 = scalar_select %p31, %s33, %s24
      %p35 = scmp.ge.s32.totalorder %s34, 2
      %s36 = scalar_select %p35, 0, %s34
      %s37 = ssub.s32 %s24, %s36
      %s38 = ssub.s32 %s25, %s32
      %s39 = sor.u32 %s37, %s38
      %p40 = scmp.eq.s32.totalorder %s39, 0
      %s42 = sadd.s32 %s41, 1
      %s43 = scalar_select %p40, %s41, %s42
      %p46 = pneg %p40
      %p47 = scmp.eq.s32.totalorder %s17, 7
      %p48 = por %p46, %p47
      %p49 = scmp.ne.s32.totalorder %s41, %s44
      %p50 = scmp.eq.s32.totalorder %s17, 0
      %p51 = por %p49, %p50
      %p52 = scmp.ne.s32.totalorder %s41, %s44
      %p53 = scmp.eq.s32.totalorder %s22, 7
      %p54 = por %p52, %p53
      %p55 = scmp.ne.s32.totalorder %s44, %s45
      %p56 = scmp.eq.s32.totalorder %s22, 0
      %p57 = por %p55, %p56
      %p58 = scmp.ne.s32.totalorder %s44, %s45
      %p59 = scmp.eq.s32.totalorder %s23, 7
      %p60 = por %p58, %p59
      %p62 = scmp.ne.s32.totalorder %s45, %s61
      %p63 = scmp.eq.s32.totalorder %s23, 0
      %p64 = por %p62, %p63
      %s66 = sadd.s32 %s65, 1
      %p69 = scmp.eq.s32.totalorder %s17, 7
      %p70 = scmp.ne.s32.totalorder %s65, %s67
      %p71 = scmp.eq.s32.totalorder %s17, 0
      %p72 = por %p70, %p71
      %p73 = scmp.ne.s32.totalorder %s65, %s67
      %p74 = scmp.eq.s32.totalorder %s22, 7
      %p75 = por %p73, %p74
      %p76 = scmp.ne.s32.totalorder %s67, %s68
      %p77 = scmp.eq.s32.totalorder %s22, 0
      %p78 = por %p76, %p77
      %p79 = scmp.ne.s32.totalorder %s67, %s68
      %p80 = scmp.eq.s32.totalorder %s23, 7
      %p81 = por %p79, %p80
      %p83 = scmp.ne.s32.totalorder %s68, %s82
      %p84 = scmp.eq.s32.totalorder %s23, 0
      %p85 = por %p83, %p84
      %s87 = sadd.s32 %s86, 1
      %p90 = scmp.eq.s32.totalorder %s17, 7
      %p91 = scmp.ne.s32.totalorder %s86, %s88
      %p92 = scmp.eq.s32.totalorder %s17, 0
      %p93 = por %p91, %p92
      %p94 = scmp.ne.s32.totalorder %s86, %s88
      %p95 = scmp.eq.s32.totalorder %s22, 7
      %p96 = por %p94, %p95
      %p97 = scmp.ne.s32.totalorder %s88, %s89
      %p98 = scmp.eq.s32.totalorder %s22, 0
      %p99 = por %p97, %p98
      %p100 = scmp.ne.s32.totalorder %s88, %s89
      %p101 = scmp.eq.s32.totalorder %s23, 7
      %p102 = por %p100, %p101
      %p104 = scmp.ne.s32.totalorder %s89, %s103
      %p105 = scmp.eq.s32.totalorder %s23, 0
      %p106 = por %p104, %p105
      %s107 = ssub.s32 %s24, %s36
      %s108 = ssub.s32 %s25, %s32
      %s109 = sor.u32 %s107, %s108
      %p110 = scmp.eq.s32.totalorder %s109, 0
      %s112 = sadd.s32 %s111, 1
      %s113 = scalar_select %p110, %s111, %s112
      %p116 = pneg %p110
      %p117 = scmp.eq.s32.totalorder %s17, 7
      %p118 = por %p116, %p117
      %p119 = scmp.ne.s32.totalorder %s111, %s114
      %p120 = scmp.eq.s32.totalorder %s17, 0
      %p121 = por %p119, %p120
      %p122 = scmp.ne.s32.totalorder %s111, %s114
      %p123 = scmp.eq.s32.totalorder %s22, 7
      %p124 = por %p122, %p123
      %p125 = scmp.ne.s32.totalorder %s114, %s115
      %p126 = scmp.eq.s32.totalorder %s22, 0
      %p127 = por %p125, %p126
      %p128 = scmp.ne.s32.totalorder %s114, %s115
      %p129 = scmp.eq.s32.totalorder %s23, 7
      %p130 = por %p128, %p129
      %p132 = scmp.ne.s32.totalorder %s115, %s131
      %p133 = scmp.eq.s32.totalorder %s23, 0
      %p134 = por %p132, %p133
      %s135 = ssub.s32 %s24, %s36
      %s136 = ssub.s32 %s25, %s32
      %s137 = sor.u32 %s135, %s136
      %p138 = scmp.eq.s32.totalorder %s137, 0
      %s140 = sadd.s32 %s139, 1
      %s141 = scalar_select %p138, %s139, %s140
      %p144 = pneg %p138
      %p145 = scmp.eq.s32.totalorder %s17, 7
      %p146 = por %p144, %p145
      %p147 = scmp.ne.s32.totalorder %s139, %s142
      %p148 = scmp.eq.s32.totalorder %s17, 0
      %p149 = por %p147, %p148
      %p150 = scmp.ne.s32.totalorder %s139, %s142
      %p151 = scmp.eq.s32.totalorder %s22, 7
      %p152 = por %p150, %p151
      %p153 = scmp.ne.s32.totalorder %s142, %s143
      %p154 = scmp.eq.s32.totalorder %s22, 0
      %p155 = por %p153, %p154
      %p156 = scmp.ne.s32.totalorder %s142, %s143
      %p157 = scmp.eq.s32.totalorder %s23, 7
      %p158 = por %p156, %p157
      %p160 = scmp.ne.s32.totalorder %s143, %s159
      %p161 = scmp.eq.s32.totalorder %s23, 0
      %p162 = por %p160, %p161
      %p163 = scmp.le.s32.totalorder 1, %s17
      %p164 = scmp.lt.s32.totalorder %s17, 9
      %p165 = pnand %p163, %p164
      %p166 = pneg %p165
      // Predicated region
      $region9: #{tpu_custom_call.1} parent=5 // pred_check
        _
      $region10: #{tpu_custom_call.1} parent=5 // pred_check_branch
        %168 = sbr.rel (%p165) target = $region12
      $region11: #{tpu_custom_call.1} parent=5 // pred_region
        %s169 = ssub.s32 %s17, 1
        // Predicated region
        $region13: #{tpu_custom_call.1} parent=11 // pred_check
          %p170 = pneg %p78
        $region14: #{tpu_custom_call.1} parent=11 // pred_check_branch
          %172 = sbr.rel (%p170) target = $region16
        $region15: #{tpu_custom_call.1} parent=11 // pred_region
          _
        $region16: #{tpu_custom_call.1} parent=11 // pred_fallthru
          _
        // Predicated region
        $region17: #{tpu_custom_call.1} parent=11 // pred_check
          %p173 = pneg %p99
        $region18: #{tpu_custom_call.1} parent=11 // pred_check_branch
          %175 = sbr.rel (%p173) target = $region20
        $region19: #{tpu_custom_call.1} parent=11 // pred_region
          _
        $region20: #{tpu_custom_call.1} parent=11 // pred_fallthru
          _
      $region12: #{tpu_custom_call.1} parent=5 // pred_fallthru
        _
      %p176 = scmp.lt.s32.totalorder %s17, 8
      // Predicated region
      $region21: #{tpu_custom_call.1} parent=5 // pred_check
        %p177 = pneg %p176
      $region22: #{tpu_custom_call.1} parent=5 // pred_check_branch
        %179 = sbr.rel (%p177) target = $region24
      $region23: #{tpu_custom_call.1} parent=5 // pred_region
        // Predicated region
        $region25: #{tpu_custom_call.1} parent=23 // pred_check
          %p180 = pneg %p51
        $region26: #{tpu_custom_call.1} parent=23 // pred_check_branch
          %182 = sbr.rel (%p180) target = $region28
        $region27: #{tpu_custom_call.1} parent=23 // pred_region
          %p183 = scmp.lt.s32.totalorder %s24, 1
          %s184 = scalar_select %p183, %s24, 1
          %p185 = scmp.lt.s32.totalorder %s25, 3
          %s186 = scalar_select %p185, %s25, 3
          %s187 = smul.addr %s186, 13
          %s188 = smul.addr %s184, 52
          %s189 = sadd.s32 %s187, %s188
          %s190 = smul.addr %s189, 8
          %s191 = scalar_lea.vmem %s0, %s190
        $region28: #{tpu_custom_call.1} parent=23 // pred_fallthru
          _
      $region24: #{tpu_custom_call.1} parent=5 // pred_fallthru
        _
      %p192 = scmp.le.s32.totalorder 1, %s17
      %p193 = scmp.lt.s32.totalorder %s17, 9
      %p194 = pnand %p192, %p193
      %p195 = pneg %p194
      // Predicated region
      $region29: #{tpu_custom_call.1} parent=5 // pred_check
        _
      $region30: #{tpu_custom_call.1} parent=5 // pred_check_branch
        %197 = sbr.rel (%p194) target = $region32
      $region31: #{tpu_custom_call.1} parent=5 // pred_region
        %s198 = ssub.s32 %s17, 1
        %p199 = scmp.lt.s32.totalorder %s26, 1
        %s200 = scalar_select %p199, %s26, 1
        %p201 = scmp.lt.s32.totalorder %s27, 3
        %s202 = scalar_select %p201, %s27, 3
        %s203 = smul.addr %s202, 13
        %s204 = smul.addr %s200, 52
        %s205 = sadd.s32 %s203, %s204
        %s206 = smul.addr %s205, 8
        %s207 = scalar_lea.vmem %s0, %s206
        %p208 = pneg %p57
        %p209 = pneg %p54
        %p210 = pneg %p78
        %p211 = pneg %p75
        %p212 = pneg %p99
        %p213 = pneg %p96
        %p214 = pneg %p127
        %p215 = pneg %p124
        %s216 = sand.u32 %s114, 1
        %s217 = scalar_lea.sflag [#allocation3], %s216
        %s218 = sand.u32 %s114, 1
        %s219 = smul.addr %s218, 64
        %s220 = scalar_lea.vmem [#allocation2], %s219
        %p221 = pneg %p155
        %p222 = pneg %p152
        %s223 = sand.u32 %s142, 1
        %s224 = scalar_lea.sflag [#allocation5], %s223
        %s225 = sand.u32 %s142, 1
        %s226 = smul.addr %s225, 2
        %s227 = scalar_lea.vmem [#allocation4], %s226
        %p228 = scmp.lt.s32.totalorder %s26, 1
        %s229 = scalar_select %p228, %s26, 1
        %p230 = scmp.lt.s32.totalorder %s27, 3
        %s231 = scalar_select %p230, %s27, 3
        %s232 = smul.addr %s231, 13
        %s233 = smul.addr %s229, 52
        %s234 = sadd.s32 %s232, %s233
        %s235 = smul.addr %s234, 8
        %s236 = scalar_lea.vmem %s0, %s235
        %s237 = smul.u32 8, %s27
        %v239 = vld [vmem:[%s236] sm:$0xff]
        %v240 = vld [vmem:[%s236 + $0x8] sm:$0xff]
        %v241 = vld [vmem:[%s236 + $0x10] sm:$0xff]
        %v242 = vld [vmem:[%s236 + $0x18] sm:$0xff]
        %v243 = vld [vmem:[%s236 + $0x20] sm:$0xff]
        %v244 = vld [vmem:[%s236 + $0x28] sm:$0xff]
        %v245 = vld [vmem:[%s236 + $0x30] sm:$0xff]
        %v246 = vld [vmem:[%s236 + $0x38] sm:$0xff]
        %v247 = vld [vmem:[%s236 + $0x40] sm:$0xff]
        %v248 = vld [vmem:[%s236 + $0x48] sm:$0xff]
        %v249 = vld [vmem:[%s236 + $0x50] sm:$0xff]
        %v250 = vld [vmem:[%s236 + $0x58] sm:$0xff]
        %v251 = vld [vmem:[%s236 + $0x60] sm:$0x3f]
        %v252 = vpack.c.bf16 %v240, %v239
        %v253 = vpack.c.bf16 %v242, %v241
        %v254 = vpack.c.bf16 %v244, %v243
        %v255 = vpack.c.bf16 %v246, %v245
        %v256 = vpack.c.bf16 %v248, %v247
        %v257 = vpack.c.bf16 %v250, %v249
        %v258 = vpack.c.bf16 %v251, %v251
        %vm259 = vsmask.f32 7424
        %v261 = vshrl.u32 %v252, 16
        %v263 = vshll.u32 %v252, 16
        %v265 = vrot.slane %v263, 1
        %v266 = vor.u32 %v261, %v265
        %v268 = vshll.u32 %v253, 16
        %v270 = vrot.slane %v268, 1
        %v271 = vsel %vm259, %v266, %v270
        %v272 = vshrl.u32 %v253, 16
        %v274 = vor.u32 %v272, %v270
        %v276 = vshll.u32 %v254, 16
        %v278 = vrot.slane %v276, 1
        %v279 = vsel %vm259, %v274, %v278
        %v280 = vshrl.u32 %v254, 16
        %v282 = vor.u32 %v280, %v278
        %v284 = vshll.u32 %v255, 16
        %v286 = vrot.slane %v284, 1
        %v287 = vsel %vm259, %v282, %v286
        %v288 = vshrl.u32 %v255, 16
        %v290 = vor.u32 %v288, %v286
        %v292 = vshll.u32 %v256, 16
        %v294 = vrot.slane %v292, 1
        %v295 = vsel %vm259, %v290, %v294
        %296 = vrot.lane.b32.xlu0 %v271, 4
        %v297 = vpop.permute.xlu0 %296
        %298 = vrot.lane.b32.xlu0 %v279, 4
        %v299 = vpop.permute.xlu0 %298
        %300 = vrot.lane.b32.xlu0 %v287, 4
        %v301 = vpop.permute.xlu0 %300
        %302 = vrot.lane.b32.xlu0 %v295, 4
        %v303 = vpop.permute.xlu0 %302
        %vm309 = vcmask 1046528
        %v310 = vrot.slane %v252, 1
        %v311 = vrot.slane %v253, 1
        %v312 = vsel %vm309, %v310, %v311
        %v313 = vrot.slane %v254, 1
        %v314 = vsel %vm309, %v311, %v313
        %v315 = vrot.slane %v255, 1
        %v316 = vsel %vm309, %v313, %v315
        %v317 = vrot.slane %v256, 1
        %v318 = vsel %vm309, %v315, %v317
        %319 = vrot.lane.b32.xlu0 %v312, 8
        %v320 = vpop.permute.xlu0 %319
        %321 = vrot.lane.b32.xlu0 %v314, 8
        %v322 = vpop.permute.xlu0 %321
        %323 = vrot.lane.b32.xlu0 %v316, 8
        %v324 = vpop.permute.xlu0 %323
        %325 = vrot.lane.b32.xlu0 %v318, 8
        %v326 = vpop.permute.xlu0 %325
        %vm327 = vsmask.f32 6400
        %v328 = vrot.slane %v261, 1
        %v329 = vrot.slane %v263, 2
        %v330 = vor.u32 %v328, %v329
        %v331 = vrot.slane %v272, 1
        %v332 = vrot.slane %v268, 2
        %v333 = vor.u32 %v331, %v332
        %v334 = vsel %vm327, %v330, %v333
        %v335 = vrot.slane %v280, 1
        %v336 = vrot.slane %v276, 2
        %v337 = vor.u32 %v335, %v336
        %v338 = vsel %vm327, %v333, %v337
        %v339 = vrot.slane %v288, 1
        %v340 = vrot.slane %v284, 2
        %v341 = vor.u32 %v339, %v340
        %v342 = vsel %vm327, %v337, %v341
        %v343 = vshrl.u32 %v256, 16
        %v345 = vrot.slane %v343, 1
        %v346 = vrot.slane %v292, 2
        %v347 = vor.u32 %v345, %v346
        %v348 = vsel %vm327, %v341, %v347
        %349 = vrot.lane.b32.xlu0 %v334, 12
        %v350 = vpop.permute.xlu0 %349
        %351 = vrot.lane.b32.xlu0 %v338, 12
        %v352 = vpop.permute.xlu0 %351
        %353 = vrot.lane.b32.xlu0 %v342, 12
        %v354 = vpop.permute.xlu0 %353
        %355 = vrot.lane.b32.xlu0 %v348, 12
        %v356 = vpop.permute.xlu0 %355
        %vm357 = vcmask 1045504
        %v358 = vrot.slane %v252, 2
        %v359 = vrot.slane %v253, 2
        %v360 = vsel %vm357, %v358, %v359
        %v361 = vrot.slane %v254, 2
        %v362 = vsel %vm357, %v359, %v361
        %v363 = vrot.slane %v255, 2
        %v364 = vsel %vm357, %v361, %v363
        %v365 = vrot.slane %v256, 2
        %v366 = vsel %vm357, %v363, %v365
        %367 = vrot.lane.b32.xlu0 %v360, 16
        %v368 = vpop.permute.xlu0 %367
        %369 = vrot.lane.b32.xlu0 %v362, 16
        %v370 = vpop.permute.xlu0 %369
        %371 = vrot.lane.b32.xlu0 %v364, 16
        %v372 = vpop.permute.xlu0 %371
        %373 = vrot.lane.b32.xlu0 %v366, 16
        %v374 = vpop.permute.xlu0 %373
        %vm375 = vsmask.f32 5376
        %v376 = vrot.slane %v261, 2
        %v377 = vrot.slane %v263, 3
        %v378 = vor.u32 %v376, %v377
        %v379 = vrot.slane %v272, 2
        %v380 = vrot.slane %v268, 3
        %v381 = vor.u32 %v379, %v380
        %v382 = vsel %vm375, %v378, %v381
        %v383 = vrot.slane %v280, 2
        %v384 = vrot.slane %v276, 3
        %v385 = vor.u32 %v383, %v384
        %v386 = vsel %vm375, %v381, %v385
        %v387 = vrot.slane %v288, 2
        %v388 = vrot.slane %v284, 3
        %v389 = vor.u32 %v387, %v388
        %v390 = vsel %vm375, %v385, %v389
        %v391 = vrot.slane %v343, 2
        %v392 = vrot.slane %v292, 3
        %v393 = vor.u32 %v391, %v392
        %v394 = vsel %vm375, %v389, %v393
        %395 = vrot.lane.b32.xlu0 %v382, 20
        %v396 = vpop.permute.xlu0 %395
        %397 = vrot.lane.b32.xlu0 %v386, 20
        %v398 = vpop.permute.xlu0 %397
        %399 = vrot.lane.b32.xlu0 %v390, 20
        %v400 = vpop.permute.xlu0 %399
        %401 = vrot.lane.b32.xlu0 %v394, 20
        %v402 = vpop.permute.xlu0 %401
        %vm403 = vcmask 1044480
        %v404 = vrot.slane %v252, 3
        %v405 = vrot.slane %v253, 3
        %v406 = vsel %vm403, %v404, %v405
        %v407 = vrot.slane %v254, 3
        %v408 = vsel %vm403, %v405, %v407
        %v409 = vrot.slane %v255, 3
        %v410 = vsel %vm403, %v407, %v409
        %v411 = vrot.slane %v256, 3
        %v412 = vsel %vm403, %v409, %v411
        %413 = vrot.lane.b32.xlu0 %v406, 24
        %v414 = vpop.permute.xlu0 %413
        %415 = vrot.lane.b32.xlu0 %v408, 24
        %v416 = vpop.permute.xlu0 %415
        %417 = vrot.lane.b32.xlu0 %v410, 24
        %v418 = vpop.permute.xlu0 %417
        %419 = vrot.lane.b32.xlu0 %v412, 24
        %v420 = vpop.permute.xlu0 %419
        %vm421 = vsmask.f32 4352
        %v422 = vrot.slane %v261, 3
        %v423 = vrot.slane %v263, 4
        %v424 = vor.u32 %v422, %v423
        %v425 = vrot.slane %v272, 3
        %v426 = vrot.slane %v268, 4
        %v427 = vor.u32 %v425, %v426
        %v428 = vsel %vm421, %v424, %v427
        %v429 = vrot.slane %v280, 3
        %v430 = vrot.slane %v276, 4
        %v431 = vor.u32 %v429, %v430
        %v432 = vsel %vm421, %v427, %v431
        %v433 = vrot.slane %v288, 3
        %v434 = vrot.slane %v284, 4
        %v435 = vor.u32 %v433, %v434
        %v436 = vsel %vm421, %v431, %v435
        %v437 = vrot.slane %v343, 3
        %v438 = vrot.slane %v292, 4
        %v439 = vor.u32 %v437, %v438
        %v440 = vsel %vm421, %v435, %v439
        %441 = vrot.lane.b32.xlu0 %v428, 28
        %v442 = vpop.permute.xlu0 %441
        %443 = vrot.lane.b32.xlu0 %v432, 28
        %v444 = vpop.permute.xlu0 %443
        %445 = vrot.lane.b32.xlu0 %v436, 28
        %v446 = vpop.permute.xlu0 %445
        %447 = vrot.lane.b32.xlu0 %v440, 28
        %v448 = vpop.permute.xlu0 %447
        %vm449 = vcmask 1043456
        %v450 = vrot.slane %v252, 4
        %v451 = vrot.slane %v253, 4
        %v452 = vsel %vm449, %v450, %v451
        %v453 = vrot.slane %v254, 4
        %v454 = vsel %vm449, %v451, %v453
        %v455 = vrot.slane %v255, 4
        %v456 = vsel %vm449, %v453, %v455
        %v457 = vrot.slane %v256, 4
        %v458 = vsel %vm449, %v455, %v457
        %459 = vrot.lane.b32.xlu0 %v452, 32
        %v460 = vpop.permute.xlu0 %459
        %461 = vrot.lane.b32.xlu0 %v454, 32
        %v462 = vpop.permute.xlu0 %461
        %463 = vrot.lane.b32.xlu0 %v456, 32
        %v464 = vpop.permute.xlu0 %463
        %465 = vrot.lane.b32.xlu0 %v458, 32
        %v466 = vpop.permute.xlu0 %465
        %vm467 = vsmask.f32 3328
        %v468 = vrot.slane %v261, 4
        %v469 = vrot.slane %v263, 5
        %v470 = vor.u32 %v468, %v469
        %v471 = vrot.slane %v272, 4
        %v472 = vrot.slane %v268, 5
        %v473 = vor.u32 %v471, %v472
        %v474 = vsel %vm467, %v470, %v473
        %v475 = vrot.slane %v280, 4
        %v476 = vrot.slane %v276, 5
        %v477 = vor.u32 %v475, %v476
        %v478 = vsel %vm467, %v473, %v477
        %v479 = vrot.slane %v288, 4
        %v480 = vrot.slane %v284, 5
        %v481 = vor.u32 %v479, %v480
        %v482 = vsel %vm467, %v477, %v481
        %v483 = vrot.slane %v343, 4
        %v484 = vrot.slane %v292, 5
        %v485 = vor.u32 %v483, %v484
        %v486 = vsel %vm467, %v481, %v485
        %487 = vrot.lane.b32.xlu0 %v474, 36
        %v488 = vpop.permute.xlu0 %487
        %489 = vrot.lane.b32.xlu0 %v478, 36
        %v490 = vpop.permute.xlu0 %489
        %491 = vrot.lane.b32.xlu0 %v482, 36
        %v492 = vpop.permute.xlu0 %491
        %493 = vrot.lane.b32.xlu0 %v486, 36
        %v494 = vpop.permute.xlu0 %493
        %vm495 = vcmask 1042432
        %v496 = vrot.slane %v252, 5
        %v497 = vrot.slane %v253, 5
        %v498 = vsel %vm495, %v496, %v497
        %v499 = vrot.slane %v254, 5
        %v500 = vsel %vm495, %v497, %v499
        %v501 = vrot.slane %v255, 5
        %v502 = vsel %vm495, %v499, %v501
        %v503 = vrot.slane %v256, 5
        %v504 = vsel %vm495, %v501, %v503
        %505 = vrot.lane.b32.xlu0 %v498, 40
        %v506 = vpop.permute.xlu0 %505
        %507 = vrot.lane.b32.xlu0 %v500, 40
        %v508 = vpop.permute.xlu0 %507
        %509 = vrot.lane.b32.xlu0 %v502, 40
        %v510 = vpop.permute.xlu0 %509
        %511 = vrot.lane.b32.xlu0 %v504, 40
        %v512 = vpop.permute.xlu0 %511
        %vm513 = vsmask.f32 2304
        %v514 = vrot.slane %v261, 5
        %v515 = vrot.slane %v263, 6
        %v516 = vor.u32 %v514, %v515
        %v517 = vrot.slane %v272, 5
        %v518 = vrot.slane %v268, 6
        %v519 = vor.u32 %v517, %v518
        %v520 = vsel %vm513, %v516, %v519
        %v521 = vrot.slane %v280, 5
        %v522 = vrot.slane %v276, 6
        %v523 = vor.u32 %v521, %v522
        %v524 = vsel %vm513, %v519, %v523
        %v525 = vrot.slane %v288, 5
        %v526 = vrot.slane %v284, 6
        %v527 = vor.u32 %v525, %v526
        %v528 = vsel %vm513, %v523, %v527
        %v529 = vrot.slane %v343, 5
        %v530 = vrot.slane %v292, 6
        %v531 = vor.u32 %v529, %v530
        %v532 = vsel %vm513, %v527, %v531
        %533 = vrot.lane.b32.xlu0 %v520, 44
        %v534 = vpop.permute.xlu0 %533
        %535 = vrot.lane.b32.xlu0 %v524, 44
        %v536 = vpop.permute.xlu0 %535
        %537 = vrot.lane.b32.xlu0 %v528, 44
        %v538 = vpop.permute.xlu0 %537
        %539 = vrot.lane.b32.xlu0 %v532, 44
        %v540 = vpop.permute.xlu0 %539
        %vm541 = vcmask 1041408
        %v542 = vrot.slane %v252, 6
        %v543 = vrot.slane %v253, 6
        %v544 = vsel %vm541, %v542, %v543
        %v545 = vrot.slane %v254, 6
        %v546 = vsel %vm541, %v543, %v545
        %v547 = vrot.slane %v255, 6
        %v548 = vsel %vm541, %v545, %v547
        %v549 = vrot.slane %v256, 6
        %v550 = vsel %vm541, %v547, %v549
        %551 = vrot.lane.b32.xlu0 %v544, 48
        %v552 = vpop.permute.xlu0 %551
        %553 = vrot.lane.b32.xlu0 %v546, 48
        %v554 = vpop.permute.xlu0 %553
        %555 = vrot.lane.b32.xlu0 %v548, 48
        %v556 = vpop.permute.xlu0 %555
        %557 = vrot.lane.b32.xlu0 %v550, 48
        %v558 = vpop.permute.xlu0 %557
        %vm559 = vsmask.f32 1280
        %v560 = vrot.slane %v261, 6
        %v561 = vrot.slane %v263, 7
        %v562 = vor.u32 %v560, %v561
        %v563 = vrot.slane %v272, 6
        %v564 = vrot.slane %v268, 7
        %v565 = vor.u32 %v563, %v564
        %v566 = vsel %vm559, %v562, %v565
        %v567 = vrot.slane %v280, 6
        %v568 = vrot.slane %v276, 7
        %v569 = vor.u32 %v567, %v568
        %v570 = vsel %vm559, %v565, %v569
        %v571 = vrot.slane %v288, 6
        %v572 = vrot.slane %v284, 7
        %v573 = vor.u32 %v571, %v572
        %v574 = vsel %vm559, %v569, %v573
        %v575 = vrot.slane %v343, 6
        %v576 = vrot.slane %v292, 7
        %v577 = vor.u32 %v575, %v576
        %v578 = vsel %vm559, %v573, %v577
        %579 = vrot.lane.b32.xlu0 %v566, 52
        %v580 = vpop.permute.xlu0 %579
        %581 = vrot.lane.b32.xlu0 %v570, 52
        %v582 = vpop.permute.xlu0 %581
        %583 = vrot.lane.b32.xlu0 %v574, 52
        %v584 = vpop.permute.xlu0 %583
        %585 = vrot.lane.b32.xlu0 %v578, 52
        %v586 = vpop.permute.xlu0 %585
        %vm587 = vcmask 1040384
        %v588 = vrot.slane %v252, 7
        %v589 = vrot.slane %v253, 7
        %v590 = vsel %vm587, %v588, %v589
        %v591 = vrot.slane %v254, 7
        %v592 = vsel %vm587, %v589, %v591
        %v593 = vrot.slane %v255, 7
        %v594 = vsel %vm587, %v591, %v593
        %v595 = vrot.slane %v256, 7
        %v596 = vsel %vm587, %v593, %v595
        %597 = vrot.lane.b32.xlu0 %v590, 56
        %v598 = vpop.permute.xlu0 %597
        %599 = vrot.lane.b32.xlu0 %v592, 56
        %v600 = vpop.permute.xlu0 %599
        %601 = vrot.lane.b32.xlu0 %v594, 56
        %v602 = vpop.permute.xlu0 %601
        %603 = vrot.lane.b32.xlu0 %v596, 56
        %v604 = vpop.permute.xlu0 %603
        %vm605 = vsmask.f32 256
        %v606 = vrot.slane %v261, 7
        %v607 = vrot.slane %v272, 7
        %v608 = vor.u32 %v607, %v268
        %v609 = vsel %vm605, %v606, %v608
        %v610 = vrot.slane %v280, 7
        %v611 = vor.u32 %v610, %v276
        %v612 = vsel %vm605, %v607, %v611
        %v613 = vrot.slane %v288, 7
        %v614 = vor.u32 %v613, %v284
        %v615 = vsel %vm605, %v610, %v614
        %v616 = vrot.slane %v343, 7
        %v617 = vor.u32 %v616, %v292
        %v618 = vsel %vm605, %v613, %v617
        %619 = vrot.lane.b32.xlu0 %v609, 60
        %v620 = vpop.permute.xlu0 %619
        %621 = vrot.lane.b32.xlu0 %v612, 60
        %v622 = vpop.permute.xlu0 %621
        %623 = vrot.lane.b32.xlu0 %v615, 60
        %v624 = vpop.permute.xlu0 %623
        %625 = vrot.lane.b32.xlu0 %v618, 60
        %v626 = vpop.permute.xlu0 %625
        %vm627 = vcmask 31744
        %v629 = vsel %vm627, %v252, %v297
        %v631 = vsel %vm627, %v253, %v299
        %v633 = vsel %vm627, %v254, %v301
        %v635 = vsel %vm627, %v255, %v303
        %vm636 = vcmask 64512
        %v638 = vsel %vm636, %v629, %v320
        %v640 = vsel %vm636, %v631, %v322
        %v642 = vsel %vm636, %v633, %v324
        %v644 = vsel %vm636, %v635, %v326
        %vm645 = vcmask 97280
        %v647 = vsel %vm645, %v638, %v350
        %v649 = vsel %vm645, %v640, %v352
        %v651 = vsel %vm645, %v642, %v354
        %v653 = vsel %vm645, %v644, %v356
        %vm654 = vcmask 130048
        %v656 = vsel %vm654, %v647, %v368
        %v658 = vsel %vm654, %v649, %v370
        %v660 = vsel %vm654, %v651, %v372
        %v662 = vsel %vm654, %v653, %v374
        %vm663 = vcmask 162816
        %v665 = vsel %vm663, %v656, %v396
        %v667 = vsel %vm663, %v658, %v398
        %v669 = vsel %vm663, %v660, %v400
        %v671 = vsel %vm663, %v662, %v402
        %vm672 = vcmask 195584
        %v674 = vsel %vm672, %v665, %v414
        %v676 = vsel %vm672, %v667, %v416
        %v678 = vsel %vm672, %v669, %v418
        %v680 = vsel %vm672, %v671, %v420
        %vm681 = vcmask 228352
        %v683 = vsel %vm681, %v674, %v442
        %v685 = vsel %vm681, %v676, %v444
        %v687 = vsel %vm681, %v678, %v446
        %v689 = vsel %vm681, %v680, %v448
        %vm690 = vcmask 261120
        %v692 = vsel %vm690, %v683, %v460
        %v694 = vsel %vm690, %v685, %v462
        %v696 = vsel %vm690, %v687, %v464
        %v698 = vsel %vm690, %v689, %v466
        %vm699 = vcmask 293888
        %v701 = vsel %vm699, %v692, %v488
        %v703 = vsel %vm699, %v694, %v490
        %v705 = vsel %vm699, %v696, %v492
        %v707 = vsel %vm699, %v698, %v494
        %vm708 = vcmask 326656
        %v710 = vsel %vm708, %v701, %v506
        %v712 = vsel %vm708, %v703, %v508
        %v714 = vsel %vm708, %v705, %v510
        %v716 = vsel %vm708, %v707, %v512
        %vm717 = vcmask 359424
        %v719 = vsel %vm717, %v710, %v534
        %v721 = vsel %vm717, %v712, %v536
        %v723 = vsel %vm717, %v714, %v538
        %v725 = vsel %vm717, %v716, %v540
        %vm726 = vcmask 392192
        %v728 = vsel %vm726, %v719, %v552
        %v730 = vsel %vm726, %v721, %v554
        %v732 = vsel %vm726, %v723, %v556
        %v734 = vsel %vm726, %v725, %v558
        %vm735 = vcmask 424960
        %v737 = vsel %vm735, %v728, %v580
        %v739 = vsel %vm735, %v730, %v582
        %v741 = vsel %vm735, %v732, %v584
        %v743 = vsel %vm735, %v734, %v586
        %vm744 = vcmask 457728
        %v746 = vsel %vm744, %v737, %v598
        %v748 = vsel %vm744, %v739, %v600
        %v750 = vsel %vm744, %v741, %v602
        %v752 = vsel %vm744, %v743, %v604
        %vm753 = vcmask 490496
        %v755 = vsel %vm753, %v746, %v620
        %v757 = vsel %vm753, %v748, %v622
        %v759 = vsel %vm753, %v750, %v624
        %v761 = vsel %vm753, %v752, %v626
        %v762 = vor.u32 %v343, %v294
        %v764 = vshll.u32 %v257, 16
        %v766 = vrot.slane %v764, 1
        %v767 = vsel %vm259, %v762, %v766
        %768 = vrot.lane.b32.xlu0 %v767, 4
        %v769 = vpop.permute.xlu0 %768
        %v771 = vrot.slane %v257, 1
        %v772 = vsel %vm309, %v317, %v771
        %773 = vrot.lane.b32.xlu0 %v772, 8
        %v774 = vpop.permute.xlu0 %773
        %v775 = vshrl.u32 %v257, 16
        %v777 = vrot.slane %v775, 1
        %v778 = vrot.slane %v764, 2
        %v779 = vor.u32 %v777, %v778
        %v780 = vsel %vm327, %v347, %v779
        %781 = vrot.lane.b32.xlu0 %v780, 12
        %v782 = vpop.permute.xlu0 %781
        %v783 = vrot.slane %v257, 2
        %v784 = vsel %vm357, %v365, %v783
        %785 = vrot.lane.b32.xlu0 %v784, 16
        %v786 = vpop.permute.xlu0 %785
        %v787 = vrot.slane %v775, 2
        %v788 = vrot.slane %v764, 3
        %v789 = vor.u32 %v787, %v788
        %v790 = vsel %vm375, %v393, %v789
        %791 = vrot.lane.b32.xlu0 %v790, 20
        %v792 = vpop.permute.xlu0 %791
        %v793 = vrot.slane %v257, 3
        %v794 = vsel %vm403, %v411, %v793
        %795 = vrot.lane.b32.xlu0 %v794, 24
        %v796 = vpop.permute.xlu0 %795
        %v797 = vrot.slane %v775, 3
        %v798 = vrot.slane %v764, 4
        %v799 = vor.u32 %v797, %v798
        %v800 = vsel %vm421, %v439, %v799
        %801 = vrot.lane.b32.xlu0 %v800, 28
        %v802 = vpop.permute.xlu0 %801
        %v803 = vrot.slane %v257, 4
        %v804 = vsel %vm449, %v457, %v803
        %805 = vrot.lane.b32.xlu0 %v804, 32
        %v806 = vpop.permute.xlu0 %805
        %v807 = vrot.slane %v775, 4
        %v808 = vrot.slane %v764, 5
        %v809 = vor.u32 %v807, %v808
        %v810 = vsel %vm467, %v485, %v809
        %811 = vrot.lane.b32.xlu0 %v810, 36
        %v812 = vpop.permute.xlu0 %811
        %v813 = vrot.slane %v257, 5
        %v814 = vsel %vm495, %v503, %v813
        %815 = vrot.lane.b32.xlu0 %v814, 40
        %v816 = vpop.permute.xlu0 %815
        %v817 = vrot.slane %v775, 5
        %v818 = vrot.slane %v764, 6
        %v819 = vor.u32 %v817, %v818
        %v820 = vsel %vm513, %v531, %v819
        %821 = vrot.lane.b32.xlu0 %v820, 44
        %v822 = vpop.permute.xlu0 %821
        %v823 = vrot.slane %v257, 6
        %v824 = vsel %vm541, %v549, %v823
        %825 = vrot.lane.b32.xlu0 %v824, 48
        %v826 = vpop.permute.xlu0 %825
        %v827 = vrot.slane %v775, 6
        %v828 = vrot.slane %v764, 7
        %v829 = vor.u32 %v827, %v828
        %v830 = vsel %vm559, %v577, %v829
        %831 = vrot.lane.b32.xlu0 %v830, 52
        %v832 = vpop.permute.xlu0 %831
        %v833 = vrot.slane %v257, 7
        %v834 = vsel %vm587, %v595, %v833
        %835 = vrot.lane.b32.xlu0 %v834, 56
        %v836 = vpop.permute.xlu0 %835
        %v837 = vrot.slane %v775, 7
        %v838 = vor.u32 %v837, %v764
        %v839 = vsel %vm605, %v616, %v838
        %840 = vrot.lane.b32.xlu0 %v839, 60
        %v841 = vpop.permute.xlu0 %840
        %v843 = vsel %vm627, %v256, %v769
        %v845 = vsel %vm636, %v843, %v774
        %v847 = vsel %vm645, %v845, %v782
        %v849 = vsel %vm654, %v847, %v786
        %v851 = vsel %vm663, %v849, %v792
        %v853 = vsel %vm672, %v851, %v796
        %v855 = vsel %vm681, %v853, %v802
        %v857 = vsel %vm690, %v855, %v806
        %v859 = vsel %vm699, %v857, %v812
        %v861 = vsel %vm708, %v859, %v816
        %v863 = vsel %vm717, %v861, %v822
        %v865 = vsel %vm726, %v863, %v826
        %v867 = vsel %vm735, %v865, %v832
        %v869 = vsel %vm744, %v867, %v836
        %v871 = vsel %vm753, %v869, %v841
        %v872 = vor.u32 %v775, %v766
        %v874 = vshll.u32 %v258, 16
        %v876 = vrot.slane %v874, 1
        %v877 = vsel %vm259, %v872, %v876
        %878 = vrot.lane.b32.xlu0 %v877, 4
        %v879 = vpop.permute.xlu0 %878
        %v881 = vrot.slane %v258, 1
        %v882 = vsel %vm309, %v771, %v881
        %883 = vrot.lane.b32.xlu0 %v882, 8
        %v884 = vpop.permute.xlu0 %883
        %v885 = vshrl.u32 %v258, 16
        %v887 = vrot.slane %v885, 1
        %v888 = vrot.slane %v874, 2
        %v889 = vor.u32 %v887, %v888
        %v890 = vsel %vm327, %v779, %v889
        %891 = vrot.lane.b32.xlu0 %v890, 12
        %v892 = vpop.permute.xlu0 %891
        %v893 = vrot.slane %v258, 2
        %v894 = vsel %vm357, %v783, %v893
        %895 = vrot.lane.b32.xlu0 %v894, 16
        %v896 = vpop.permute.xlu0 %895
        %v897 = vrot.slane %v885, 2
        %v898 = vrot.slane %v874, 3
        %v899 = vor.u32 %v897, %v898
        %v900 = vsel %vm375, %v789, %v899
        %901 = vrot.lane.b32.xlu0 %v900, 20
        %v902 = vpop.permute.xlu0 %901
        %v903 = vrot.slane %v258, 3
        %v904 = vsel %vm403, %v793, %v903
        %905 = vrot.lane.b32.xlu0 %v904, 24
        %v906 = vpop.permute.xlu0 %905
        %v908 = vsel %vm627, %v257, %v879
        %v910 = vsel %vm636, %v908, %v884
        %v912 = vsel %vm645, %v910, %v892
        %v914 = vsel %vm654, %v912, %v896
        %v916 = vsel %vm663, %v914, %v902
        %v918 = vsel %vm672, %v916, %v906
        %923 = vrot.lane.b32.xlu0 %v757, 64
        %v924 = vpop.permute.xlu0 %923
        %925 = vrot.lane.b32.xlu0 %v759, 64
        %v926 = vpop.permute.xlu0 %925
        %927 = vrot.lane.b32.xlu0 %v761, 64
        %v928 = vpop.permute.xlu0 %927
        %929 = vrot.lane.b32.xlu0 %v871, 64
        %v930 = vpop.permute.xlu0 %929
        %vm931 = vcmask 523264
        %v933 = vsel %vm931, %v755, %v924
        %v936 = vsel %vm931, %v757, %v926
        %v939 = vsel %vm931, %v759, %v928
        %v942 = vsel %vm931, %v761, %v930
        %v944 = vld [vmem:[%s1] sm:$0xf]
        %v945 = vld [vmem:[%s1 + $0x4] sm:$0xf]
        %v946 = vld [vmem:[%s1 + $0x8] sm:$0xf]
        %v947 = vld [vmem:[%s1 + $0xc] sm:$0xf]
        %v948 = vld [vmem:[%s1 + $0x10] sm:$0xf]
        %v949 = vld [vmem:[%s1 + $0x14] sm:$0xf]
        %v950 = vld [vmem:[%s1 + $0x18] sm:$0xf]
        %v951 = vld [vmem:[%s1 + $0x1c] sm:$0xf]
        %v952 = vld [vmem:[%s1 + $0x20] sm:$0xf]
        %v953 = vld [vmem:[%s1 + $0x24] sm:$0xf]
        %v954 = vld [vmem:[%s1 + $0x28] sm:$0xf]
        %v955 = vld [vmem:[%s1 + $0x2c] sm:$0xf]
        %v956 = vld [vmem:[%s1 + $0x30] sm:$0xf]
        %v957 = vld [vmem:[%s1 + $0x34] sm:$0xf]
        %v958 = vld [vmem:[%s1 + $0x38] sm:$0xf]
        %v959 = vld [vmem:[%s1 + $0x3c] sm:$0xf]
        %v960 = vld [vmem:[%s1 + $0x40] sm:$0xf]
        %v961 = vld [vmem:[%s1 + $0x44] sm:$0xf]
        %v962 = vld [vmem:[%s1 + $0x48] sm:$0xf]
        %v963 = vld [vmem:[%s1 + $0x4c] sm:$0x3]
        %v984 = vunpack.c.l.b16 %v944
        %v985 = vunpack.c.l.b16 %v945
        %v986 = vunpack.c.l.b16 %v946
        %v987 = vunpack.c.l.b16 %v947
        %v988 = vunpack.c.l.b16 %v948
        %v989 = vunpack.c.l.b16 %v949
        %v990 = vunpack.c.l.b16 %v950
        %v991 = vunpack.c.l.b16 %v951
        %v992 = vunpack.c.l.b16 %v952
        %v993 = vunpack.c.l.b16 %v953
        %v994 = vunpack.c.l.b16 %v954
        %v995 = vunpack.c.l.b16 %v955
        %v996 = vunpack.c.l.b16 %v956
        %v997 = vunpack.c.l.b16 %v957
        %v998 = vunpack.c.l.b16 %v958
        %v999 = vunpack.c.l.b16 %v959
        %v1000 = vunpack.c.l.b16 %v960
        %v1001 = vunpack.c.l.b16 %v961
        %v1002 = vunpack.c.l.b16 %v962
        %v1003 = vunpack.c.l.b16 %v963
        %v1004 = vpack.c.b16 %v985, %v984
        %v1005 = vpack.c.b16 %v987, %v986
        %v1006 = vpack.c.b16 %v989, %v988
        %v1007 = vpack.c.b16 %v991, %v990
        %v1008 = vpack.c.b16 %v993, %v992
        %v1009 = vpack.c.b16 %v995, %v994
        %v1010 = vpack.c.b16 %v997, %v996
        %v1011 = vpack.c.b16 %v999, %v998
        %v1012 = vpack.c.b16 %v1001, %v1000
        %v1013 = vpack.c.b16 %v1003, %v1002
        %v1023 = vsel %vm681, %v678, 0
        %v1025 = vsel %vm681, %v680, 0
        %v1027 = vsel %vm681, %v853, 0
        %v1029 = vsel %vm681, %v918, 0
        %vm1031 = vcmask 1045504
        %v1033 = vsel %vm1031, %v1013, 0
        %1035 = vmatprep.subr.bf16.mxu0 0
        %1036 = vmatpush1.bf16.msra.mxu0 %v1004
        %1037 = vmatprep.subr.bf16.mxu0 0
        %1038 = vmatpush1.bf16.msra.mxu0 %v1005
        %1039 = vmatprep.subr.bf16.mxu0 0
        %1040 = vmatpush1.bf16.msra.mxu0 %v1006
        %1041 = vmatprep.subr.bf16.mxu0 0
        %1042 = vmatpush1.bf16.msra.mxu0 %v1007
        %1043 = vmatprep.subr.bf16.mxu0 0
        %1044 = vmatpush1.bf16.msra.mxu0 %v1008
        %1045 = vmatprep.subr.bf16.mxu0 0
        %1046 = vmatpush1.bf16.msra.mxu0 %v1009
        %1047 = vmatprep.subr.bf16.mxu0 0
        %1048 = vmatpush1.bf16.msra.mxu0 %v1010
        %1049 = vmatprep.subr.bf16.mxu0 0
        %1050 = vmatpush1.bf16.msra.mxu0 %v1011
        %1051 = vmatprep.subr.bf16.mxu0 0
        %1052 = vmatpush1.bf16.msra.mxu0 %v1012
        %1053 = vmatprep.subr.bf16.mxu0 0
        %1054 = vmatpush1.bf16.msra.mxu0 %v1033
        %1055 = vmatprep.subr.bf16.mxu0 0
        %1056 = vmatpush1.bf16.msra.mxu0 0
        %1057 = vmatprep.subr.bf16.mxu0 0
        %1058 = vmatpush1.bf16.msra.mxu0 0
        %1059 = vmatprep.subr.bf16.mxu0 0
        %1060 = vmatpush1.bf16.msra.mxu0 0
        %1061 = vmatprep.subr.bf16.mxu0 0
        %1062 = vmatpush1.bf16.msra.mxu0 0
        %1063 = vmatprep.subr.bf16.mxu0 0
        %1064 = vmatpush1.bf16.msra.mxu0 0
        %1065 = vmatprep.subr.bf16.mxu0 0
        %1066 = vmatpush1.bf16.msra.mxu0 0
        %1067 = vmatprep.mubr.bf16.mxu0 %v1023
        %1068 = vmatmul.mubr.bf16.gmra.mrb[0].mxu0 %v933
        %v1069 = vpop.f32.mrb[0].mxu0
        %v1070 = vadd.f32 0.0, %v1069
        %v1071 = vpop.f32.mrb[0].mxu0
        %v1072 = vpop.f32.mrb[0].mxu0
        %v1073 = vadd.f32 0.0, %v1072
        %v1074 = vpop.f32.mrb[0].mxu0
        %1075 = vmatprep.mubr.bf16.mxu0 %v1025
        %1076 = vmatmul.mubr.bf16.gmra.mrb[0].mxu0 %v936
        %v1077 = vpop.f32.mrb[0].mxu0
        %v1078 = vadd.f32 0.0, %v1077
        %v1079 = vpop.f32.mrb[0].mxu0
        %v1080 = vpop.f32.mrb[0].mxu0
        %v1081 = vadd.f32 0.0, %v1080
        %v1082 = vpop.f32.mrb[0].mxu0
        %1083 = vmatprep.mubr.bf16.mxu0 %v1027
        %1084 = vmatmul.mubr.bf16.gmra.mrb[0].mxu0 %v939
        %v1085 = vpop.f32.mrb[0].mxu0
        %v1086 = vadd.f32 0.0, %v1085
        %v1087 = vpop.f32.mrb[0].mxu0
        %v1088 = vpop.f32.mrb[0].mxu0
        %v1089 = vadd.f32 0.0, %v1088
        %v1090 = vpop.f32.mrb[0].mxu0
        %1091 = vmatprep.mubr.bf16.mxu0 %v1029
        %1092 = vmatmul.mubr.bf16.gmra.mrb[0].mxu0 %v942
        %v1093 = vpop.f32.mrb[0].mxu0
        %v1094 = vadd.f32 0.0, %v1093
        %v1095 = vpop.f32.mrb[0].mxu0
        %v1096 = vpop.f32.mrb[0].mxu0
        %v1097 = vadd.f32 0.0, %v1096
        %v1098 = vpop.f32.mrb[0].mxu0
        %1099 = vdwg.mxu0
        %s1100 = smul.u32 %s27, 64
        %v1101 = vlaneseq
        %v1102 = vshrl.u32 %v1101, 7
        %v1103 = vadd.s32 %v1102, 8
        %v1104 = vadd.s32 %v1102, 16
        %v1105 = vadd.s32 %v1102, 24
        %v1106 = vadd.s32 %v1102, 32
        %v1107 = vadd.s32 %v1102, 40
        %v1108 = vadd.s32 %v1102, 48
        %v1109 = vadd.s32 %v1102, 56
        %v1110 = vstv %s1100
        %v1111 = vadd.s32 %v1110, %v1102
        %v1112 = vadd.s32 %v1110, %v1103
        %v1113 = vadd.s32 %v1110, %v1104
        %v1114 = vadd.s32 %v1110, %v1105
        %v1115 = vadd.s32 %v1110, %v1106
        %v1116 = vadd.s32 %v1110, %v1107
        %v1117 = vadd.s32 %v1110, %v1108
        %v1118 = vadd.s32 %v1110, %v1109
        %vm1119 = vcmp.eq.s32.totalorder %v1111, 0
        %vm1120 = vcmp.eq.s32.totalorder %v1112, 0
        %vm1121 = vcmp.eq.s32.totalorder %v1113, 0
        %vm1122 = vcmp.eq.s32.totalorder %v1114, 0
        %vm1123 = vcmp.eq.s32.totalorder %v1115, 0
        %vm1124 = vcmp.eq.s32.totalorder %v1116, 0
        %vm1125 = vcmp.eq.s32.totalorder %v1117, 0
        %vm1126 = vcmp.eq.s32.totalorder %v1118, 0
        %v1127 = vsel %vm1119, 1, 0
        %v1128 = vsel %vm1120, 1, 0
        %v1129 = vsel %vm1121, 1, 0
        %v1130 = vsel %vm1122, 1, 0
        %v1131 = vsel %vm1123, 1, 0
        %v1132 = vsel %vm1124, 1, 0
        %v1133 = vsel %vm1125, 1, 0
        %v1134 = vsel %vm1126, 1, 0
        %vm1135 = vcmp.eq.s32.totalorder %v1127, 1
        %vm1136 = vcmp.eq.s32.totalorder %v1128, 1
        %vm1137 = vcmp.eq.s32.totalorder %v1129, 1
        %vm1138 = vcmp.eq.s32.totalorder %v1130, 1
        %vm1139 = vcmp.eq.s32.totalorder %v1131, 1
        %vm1140 = vcmp.eq.s32.totalorder %v1132, 1
        %vm1141 = vcmp.eq.s32.totalorder %v1133, 1
        %vm1142 = vcmp.eq.s32.totalorder %v1134, 1
        %v1152 = vrot.slane %v241, 2
        %v1153 = vrot.slane %v242, 2
        %v1154 = vsel %vm1031, %v1152, %v1153
        %v1155 = vrot.slane %v243, 2
        %v1156 = vsel %vm1031, %v1153, %v1155
        %v1157 = vrot.slane %v244, 2
        %v1158 = vsel %vm1031, %v1155, %v1157
        %v1159 = vrot.slane %v245, 2
        %v1160 = vsel %vm1031, %v1157, %v1159
        %v1161 = vrot.slane %v246, 2
        %v1162 = vsel %vm1031, %v1159, %v1161
        %v1163 = vrot.slane %v247, 2
        %v1164 = vsel %vm1031, %v1161, %v1163
        %v1165 = vrot.slane %v248, 2
        %v1166 = vsel %vm1031, %v1163, %v1165
        %v1167 = vrot.slane %v249, 2
        %v1168 = vsel %vm1031, %v1165, %v1167
        %v1177 = vsel %vm1135, -inf, %v1154
        %v1178 = vsel %vm1136, -inf, %v1156
        %v1179 = vsel %vm1137, -inf, %v1158
        %v1180 = vsel %vm1138, -inf, %v1160
        %v1181 = vsel %vm1139, -inf, %v1162
        %v1182 = vsel %vm1140, -inf, %v1164
        %v1183 = vsel %vm1141, -inf, %v1166
        %v1184 = vsel %vm1142, -inf, %v1168
        %vm1185 = vcmp.eq.s32.totalorder %v1111, 199
        %vm1186 = vcmp.eq.s32.totalorder %v1112, 199
        %vm1187 = vcmp.eq.s32.totalorder %v1113, 199
        %vm1188 = vcmp.eq.s32.totalorder %v1114, 199
        %vm1189 = vcmp.eq.s32.totalorder %v1115, 199
        %vm1190 = vcmp.eq.s32.totalorder %v1116, 199
        %vm1191 = vcmp.eq.s32.totalorder %v1117, 199
        %vm1192 = vcmp.eq.s32.totalorder %v1118, 199
        %v1193 = vsel %vm1185, 1, 0
        %v1194 = vsel %vm1186, 1, 0
        %v1195 = vsel %vm1187, 1, 0
        %v1196 = vsel %vm1188, 1, 0
        %v1197 = vsel %vm1189, 1, 0
        %v1198 = vsel %vm1190, 1, 0
        %v1199 = vsel %vm1191, 1, 0
        %v1200 = vsel %vm1192, 1, 0
        %vm1201 = vcmp.eq.s32.totalorder %v1193, 1
        %vm1202 = vcmp.eq.s32.totalorder %v1194, 1
        %vm1203 = vcmp.eq.s32.totalorder %v1195, 1
        %vm1204 = vcmp.eq.s32.totalorder %v1196, 1
        %vm1205 = vcmp.eq.s32.totalorder %v1197, 1
        %vm1206 = vcmp.eq.s32.totalorder %v1198, 1
        %vm1207 = vcmp.eq.s32.totalorder %v1199, 1
        %vm1208 = vcmp.eq.s32.totalorder %v1200, 1
        %vm1209 = vcmask 1043456
        %v1210 = vrot.slane %v241, 4
        %v1211 = vrot.slane %v242, 4
        %v1212 = vsel %vm1209, %v1210, %v1211
        %v1213 = vrot.slane %v243, 4
        %v1214 = vsel %vm1209, %v1211, %v1213
        %v1215 = vrot.slane %v244, 4
        %v1216 = vsel %vm1209, %v1213, %v1215
        %v1217 = vrot.slane %v245, 4
        %v1218 = vsel %vm1209, %v1215, %v1217
        %v1219 = vrot.slane %v246, 4
        %v1220 = vsel %vm1209, %v1217, %v1219
        %v1221 = vrot.slane %v247, 4
        %v1222 = vsel %vm1209, %v1219, %v1221
        %v1223 = vrot.slane %v248, 4
        %v1224 = vsel %vm1209, %v1221, %v1223
        %v1225 = vrot.slane %v249, 4
        %v1226 = vsel %vm1209, %v1223, %v1225
        %v1235 = vsel %vm1201, -inf, %v1212
        %v1236 = vsel %vm1202, -inf, %v1214
        %v1237 = vsel %vm1203, -inf, %v1216
        %v1238 = vsel %vm1204, -inf, %v1218
        %v1239 = vsel %vm1205, -inf, %v1220
        %v1240 = vsel %vm1206, -inf, %v1222
        %v1241 = vsel %vm1207, -inf, %v1224
        %v1242 = vsel %vm1208, -inf, %v1226
        %vm1243 = vcmask 1044480
        %v1244 = vrot.slane %v241, 3
        %v1245 = vrot.slane %v242, 3
        %v1246 = vsel %vm1243, %v1244, %v1245
        %v1247 = vrot.slane %v243, 3
        %v1248 = vsel %vm1243, %v1245, %v1247
        %v1249 = vrot.slane %v244, 3
        %v1250 = vsel %vm1243, %v1247, %v1249
        %v1251 = vrot.slane %v245, 3
        %v1252 = vsel %vm1243, %v1249, %v1251
        %v1253 = vrot.slane %v246, 3
        %v1254 = vsel %vm1243, %v1251, %v1253
        %v1255 = vrot.slane %v247, 3
        %v1256 = vsel %vm1243, %v1253, %v1255
        %v1257 = vrot.slane %v248, 3
        %v1258 = vsel %vm1243, %v1255, %v1257
        %v1259 = vrot.slane %v249, 3
        %v1260 = vsel %vm1243, %v1257, %v1259
        %v1269 = vmax.f32 %v1177, %v1246
        %v1270 = vmax.f32 %v1178, %v1248
        %v1271 = vmax.f32 %v1179, %v1250
        %v1272 = vmax.f32 %v1180, %v1252
        %v1273 = vmax.f32 %v1181, %v1254
        %v1274 = vmax.f32 %v1182, %v1256
        %v1275 = vmax.f32 %v1183, %v1258
        %v1276 = vmax.f32 %v1184, %v1260
        %v1277 = vmax.f32 %v1269, %v1235
        %v1278 = vmax.f32 %v1270, %v1236
        %v1279 = vmax.f32 %v1271, %v1237
        %v1280 = vmax.f32 %v1272, %v1238
        %v1281 = vmax.f32 %v1273, %v1239
        %v1282 = vmax.f32 %v1274, %v1240
        %v1283 = vmax.f32 %v1275, %v1241
        %v1284 = vmax.f32 %v1276, %v1242
        %v1285 = vpack.c.bf16 %v1278, %v1277
        %v1286 = vpack.c.bf16 %v1280, %v1279
        %v1287 = vpack.c.bf16 %v1282, %v1281
        %v1288 = vpack.c.bf16 %v1284, %v1283
        %v1289 = vld [vmem:[%s2] sm:$0x3]
        %v1291 = vsel %vm627, %v1285, 0
        %v1294 = vsel %vm627, %v1286, 0
        %v1297 = vsel %vm627, %v1287, 0
        %v1300 = vsel %vm627, %v1288, 0
        %vm1302 = vcmask 1041408
        %v1304 = vsel %vm1302, %v1289, 0
        %1306 = vmatprep.subr.bf16.mxu0 0
        %1307 = vmatpush1.bf16.msra.mxu0 %v1304
        %1308 = vmatprep.subr.bf16.mxu0 0
        %1309 = vmatpush1.bf16.msra.mxu0 0
        %1310 = vmatprep.subr.bf16.mxu0 0
        %1311 = vmatpush1.bf16.msra.mxu0 0
        %1312 = vmatprep.subr.bf16.mxu0 0
        %1313 = vmatpush1.bf16.msra.mxu0 0
        %1314 = vmatprep.subr.bf16.mxu0 0
        %1315 = vmatpush1.bf16.msra.mxu0 0
        %1316 = vmatprep.subr.bf16.mxu0 0
        %1317 = vmatpush1.bf16.msra.mxu0 0
        %1318 = vmatprep.subr.bf16.mxu0 0
        %1319 = vmatpush1.bf16.msra.mxu0 0
        %1320 = vmatprep.subr.bf16.mxu0 0
        %1321 = vmatpush1.bf16.msra.mxu0 0
        %1322 = vmatprep.subr.bf16.mxu0 0
        %1323 = vmatpush1.bf16.msra.mxu0 0
        %1324 = vmatprep.subr.bf16.mxu0 0
        %1325 = vmatpush1.bf16.msra.mxu0 0
        %1326 = vmatprep.subr.bf16.mxu0 0
        %1327 = vmatpush1.bf16.msra.mxu0 0
        %1328 = vmatprep.subr.bf16.mxu0 0
        %1329 = vmatpush1.bf16.msra.mxu0 0
        %1330 = vmatprep.subr.bf16.mxu0 0
        %1331 = vmatpush1.bf16.msra.mxu0 0
        %1332 = vmatprep.subr.bf16.mxu0 0
        %1333 = vmatpush1.bf16.msra.mxu0 0
        %1334 = vmatprep.subr.bf16.mxu0 0
        %1335 = vmatpush1.bf16.msra.mxu0 0
        %1336 = vmatprep.subr.bf16.mxu0 0
        %1337 = vmatpush1.bf16.msra.mxu0 0
        %1338 = vmatprep.mubr.bf16.mxu0 0
        %1339 = vmatmul.mubr.bf16.gmra.mrb[0].mxu0 %v1291
        %v1340 = vpop.f32.mrb[0].mxu0
        %v1341 = vadd.f32 0.0, %v1340
        %v1342 = vpop.f32.mrb[0].mxu0
        %v1343 = vpop.f32.mrb[0].mxu0
        %v1344 = vadd.f32 0.0, %v1343
        %v1345 = vpop.f32.mrb[0].mxu0
        %1346 = vmatprep.mubr.bf16.mxu0 0
        %1347 = vmatmul.mubr.bf16.gmra.mrb[0].mxu0 %v1294
        %v1348 = vpop.f32.mrb[0].mxu0
        %v1349 = vadd.f32 0.0, %v1348
        %v1350 = vpop.f32.mrb[0].mxu0
        %v1351 = vpop.f32.mrb[0].mxu0
        %v1352 = vadd.f32 0.0, %v1351
        %v1353 = vpop.f32.mrb[0].mxu0
        %1354 = vmatprep.mubr.bf16.mxu0 0
        %1355 = vmatmul.mubr.bf16.gmra.mrb[0].mxu0 %v1297
        %v1356 = vpop.f32.mrb[0].mxu0
        %v1357 = vadd.f32 0.0, %v1356
        %v1358 = vpop.f32.mrb[0].mxu0
        %v1359 = vpop.f32.mrb[0].mxu0
        %v1360 = vadd.f32 0.0, %v1359
        %v1361 = vpop.f32.mrb[0].mxu0
        %1362 = vmatprep.mubr.bf16.mxu0 0
        %1363 = vmatmul.mubr.bf16.gmra.mrb[0].mxu0 %v1300
        %v1364 = vpop.f32.mrb[0].mxu0
        %v1365 = vadd.f32 0.0, %v1364
        %v1366 = vpop.f32.mrb[0].mxu0
        %v1367 = vpop.f32.mrb[0].mxu0
        %v1368 = vadd.f32 0.0, %v1367
        %v1369 = vpop.f32.mrb[0].mxu0
        %1370 = vdwg.mxu0
        %vm1371 = vcmask 785408
        %1372 = vst.msk [vmem:[%s220] sm:$0xff] %vm1371, %v1070
        %1373 = vst.msk [vmem:[%s220 + $0x8] sm:$0xff] %vm1371, %v1073
        %1374 = vst.msk [vmem:[%s220 + $0x10] sm:$0xff] %vm1371, %v1078
        %1375 = vst.msk [vmem:[%s220 + $0x18] sm:$0xff] %vm1371, %v1081
        %1376 = vst.msk [vmem:[%s220 + $0x20] sm:$0xff] %vm1371, %v1086
        %1377 = vst.msk [vmem:[%s220 + $0x28] sm:$0xff] %vm1371, %v1089
        %1378 = vst.msk [vmem:[%s220 + $0x30] sm:$0xff] %vm1371, %v1094
        %1379 = vst.msk [vmem:[%s220 + $0x38] sm:$0xff] %vm1371, %v1097
        %1388 = vrot.lane.b32.xlu0 %v1341, 96
        %v1389 = vpop.permute.xlu0 %1388
        %1390 = vrot.lane.b32.xlu0 %v1344, 96
        %v1391 = vpop.permute.xlu0 %1390
        %1392 = vrot.lane.b32.xlu0 %v1349, 96
        %v1393 = vpop.permute.xlu0 %1392
        %1394 = vrot.lane.b32.xlu0 %v1352, 96
        %v1395 = vpop.permute.xlu0 %1394
        %1396 = vrot.lane.b32.xlu0 %v1357, 96
        %v1397 = vpop.permute.xlu0 %1396
        %1398 = vrot.lane.b32.xlu0 %v1360, 96
        %v1399 = vpop.permute.xlu0 %1398
        %1400 = vrot.lane.b32.xlu0 %v1365, 96
        %v1401 = vpop.permute.xlu0 %1400
        %1402 = vrot.lane.b32.xlu0 %v1368, 96
        %v1403 = vpop.permute.xlu0 %1402
        %vm1412 = vcmask 1048320
        %1413 = vst.msk [vmem:[%s220] sm:$0xff] %vm1412, %v1389
        %1414 = vst.msk [vmem:[%s220 + $0x8] sm:$0xff] %vm1412, %v1391
        %1415 = vst.msk [vmem:[%s220 + $0x10] sm:$0xff] %vm1412, %v1393
        %1416 = vst.msk [vmem:[%s220 + $0x18] sm:$0xff] %vm1412, %v1395
        %1417 = vst.msk [vmem:[%s220 + $0x20] sm:$0xff] %vm1412, %v1397
        %1418 = vst.msk [vmem:[%s220 + $0x28] sm:$0xff] %vm1412, %v1399
        %1419 = vst.msk [vmem:[%s220 + $0x30] sm:$0xff] %vm1412, %v1401
        %1420 = vst.msk [vmem:[%s220 + $0x38] sm:$0xff] %vm1412, %v1403
        %vm1421 = vcmp.lt.s32.totalorder %v1111, 200
        %vm1422 = vcmp.lt.s32.totalorder %v1112, 200
        %vm1423 = vcmp.lt.s32.totalorder %v1113, 200
        %vm1424 = vcmp.lt.s32.totalorder %v1114, 200
        %vm1425 = vcmp.lt.s32.totalorder %v1115, 200
        %vm1426 = vcmp.lt.s32.totalorder %v1116, 200
        %vm1427 = vcmp.lt.s32.totalorder %v1117, 200
        %vm1428 = vcmp.lt.s32.totalorder %v1118, 200
        %v1429 = vsel %vm1421, 1, 0
        %v1430 = vsel %vm1422, 1, 0
        %v1431 = vsel %vm1423, 1, 0
        %v1432 = vsel %vm1424, 1, 0
        %v1433 = vsel %vm1425, 1, 0
        %v1434 = vsel %vm1426, 1, 0
        %v1435 = vsel %vm1427, 1, 0
        %v1436 = vsel %vm1428, 1, 0
        %v1437 = vcvt.s32.f32 %v1429
        %v1438 = vcvt.s32.f32 %v1430
        %v1439 = vcvt.s32.f32 %v1431
        %v1440 = vcvt.s32.f32 %v1432
        %v1441 = vcvt.s32.f32 %v1433
        %v1442 = vcvt.s32.f32 %v1434
        %v1443 = vcvt.s32.f32 %v1435
        %v1444 = vcvt.s32.f32 %v1436
        %v1445 = vmul.f32 %v1070, %v1437
        %v1446 = vmul.f32 %v1073, %v1438
        %v1447 = vmul.f32 %v1078, %v1439
        %v1448 = vmul.f32 %v1081, %v1440
        %v1449 = vmul.f32 %v1086, %v1441
        %v1450 = vmul.f32 %v1089, %v1442
        %v1451 = vmul.f32 %v1094, %v1443
        %v1452 = vmul.f32 %v1097, %v1444
        %v1453 = vmul.f32 %v1341, %v1437
        %v1454 = vmul.f32 %v1344, %v1438
        %v1455 = vmul.f32 %v1349, %v1439
        %v1456 = vmul.f32 %v1352, %v1440
        %v1457 = vmul.f32 %v1357, %v1441
        %v1458 = vmul.f32 %v1360, %v1442
        %v1459 = vmul.f32 %v1365, %v1443
        %v1460 = vmul.f32 %v1368, %v1444
        %v1461 = vsel %vm1371, %v1445, 0.0
        %v1462 = vsel %vm1371, %v1446, 0.0
        %v1463 = vadd.f32 %v1461, %v1462
        %v1464 = vsel %vm1371, %v1447, 0.0
        %v1465 = vadd.f32 %v1463, %v1464
        %v1466 = vsel %vm1371, %v1448, 0.0
        %v1467 = vadd.f32 %v1465, %v1466
        %v1468 = vsel %vm1371, %v1449, 0.0
        %v1469 = vadd.f32 %v1467, %v1468
        %v1470 = vsel %vm1371, %v1450, 0.0
        %v1471 = vadd.f32 %v1469, %v1470
        %v1472 = vsel %vm1371, %v1451, 0.0
        %v1473 = vadd.f32 %v1471, %v1472
        %v1474 = vsel %vm1371, %v1452, 0.0
        %v1475 = vadd.f32 %v1473, %v1474
        %v1476 = vrot.slane %v1475, 4
        %v1477 = vadd.f32 %v1475, %v1476
        %v1478 = vrot.slane %v1477, 2
        %v1479 = vadd.f32 %v1477, %v1478
        %v1480 = vrot.slane %v1479, 1
        %v1481 = vadd.f32 %v1479, %v1480
        %vm1482 = vcmask 778240
        %1483 = vst.msk [vmem:[%s227] sm:$0x1] %vm1482, %v1481
        %v1484 = vsel %vm690, %v1453, 0.0
        %v1485 = vsel %vm690, %v1454, 0.0
        %v1486 = vadd.f32 %v1484, %v1485
        %v1487 = vsel %vm690, %v1455, 0.0
        %v1488 = vadd.f32 %v1486, %v1487
        %v1489 = vsel %vm690, %v1456, 0.0
        %v1490 = vadd.f32 %v1488, %v1489
        %v1491 = vsel %vm690, %v1457, 0.0
        %v1492 = vadd.f32 %v1490, %v1491
        %v1493 = vsel %vm690, %v1458, 0.0
        %v1494 = vadd.f32 %v1492, %v1493
        %v1495 = vsel %vm690, %v1459, 0.0
        %v1496 = vadd.f32 %v1494, %v1495
        %v1497 = vsel %vm690, %v1460, 0.0
        %v1498 = vadd.f32 %v1496, %v1497
        %v1499 = vrot.slane %v1498, 4
        %v1500 = vadd.f32 %v1498, %v1499
        %v1501 = vrot.slane %v1500, 2
        %v1502 = vadd.f32 %v1500, %v1501
        %v1503 = vrot.slane %v1502, 1
        %v1504 = vadd.f32 %v1502, %v1503
        %1506 = vrot.lane.b32.xlu0 %v1504, 96
        %v1507 = vpop.permute.xlu0 %1506
        %vm1509 = vcmask 1041152
        %1510 = vst.msk [vmem:[%s227] sm:$0x1] %vm1509, %v1507
        %v1511 = vmul.f32 %v1445, %v1070
        %v1512 = vmul.f32 %v1446, %v1073
        %v1513 = vmul.f32 %v1447, %v1078
        %v1514 = vmul.f32 %v1448, %v1081
        %v1515 = vmul.f32 %v1449, %v1086
        %v1516 = vmul.f32 %v1450, %v1089
        %v1517 = vmul.f32 %v1451, %v1094
        %v1518 = vmul.f32 %v1452, %v1097
        %v1519 = vsel %vm1371, %v1511, 0.0
        %v1520 = vsel %vm1371, %v1512, 0.0
        %v1521 = vadd.f32 %v1519, %v1520
        %v1522 = vsel %vm1371, %v1513, 0.0
        %v1523 = vadd.f32 %v1521, %v1522
        %v1524 = vsel %vm1371, %v1514, 0.0
        %v1525 = vadd.f32 %v1523, %v1524
        %v1526 = vsel %vm1371, %v1515, 0.0
        %v1527 = vadd.f32 %v1525, %v1526
        %v1528 = vsel %vm1371, %v1516, 0.0
        %v1529 = vadd.f32 %v1527, %v1528
        %v1530 = vsel %vm1371, %v1517, 0.0
        %v1531 = vadd.f32 %v1529, %v1530
        %v1532 = vsel %vm1371, %v1518, 0.0
        %v1533 = vadd.f32 %v1531, %v1532
        %v1534 = vrot.slane %v1533, 4
        %v1535 = vadd.f32 %v1533, %v1534
        %v1536 = vrot.slane %v1535, 2
        %v1537 = vadd.f32 %v1535, %v1536
        %v1538 = vrot.slane %v1537, 1
        %v1539 = vadd.f32 %v1537, %v1538
        %1540 = vst.msk [vmem:[%s227 + $0x1] sm:$0x1] %vm1482, %v1539
        %v1541 = vmul.f32 %v1453, %v1341
        %v1542 = vmul.f32 %v1454, %v1344
        %v1543 = vmul.f32 %v1455, %v1349
        %v1544 = vmul.f32 %v1456, %v1352
        %v1545 = vmul.f32 %v1457, %v1357
        %v1546 = vmul.f32 %v1458, %v1360
        %v1547 = vmul.f32 %v1459, %v1365
        %v1548 = vmul.f32 %v1460, %v1368
        %v1549 = vsel %vm690, %v1541, 0.0
        %v1550 = vsel %vm690, %v1542, 0.0
        %v1551 = vadd.f32 %v1549, %v1550
        %v1552 = vsel %vm690, %v1543, 0.0
        %v1553 = vadd.f32 %v1551, %v1552
        %v1554 = vsel %vm690, %v1544, 0.0
        %v1555 = vadd.f32 %v1553, %v1554
        %v1556 = vsel %vm690, %v1545, 0.0
        %v1557 = vadd.f32 %v1555, %v1556
        %v1558 = vsel %vm690, %v1546, 0.0
        %v1559 = vadd.f32 %v1557, %v1558
        %v1560 = vsel %vm690, %v1547, 0.0
        %v1561 = vadd.f32 %v1559, %v1560
        %v1562 = vsel %vm690, %v1548, 0.0
        %v1563 = vadd.f32 %v1561, %v1562
        %v1564 = vrot.slane %v1563, 4
        %v1565 = vadd.f32 %v1563, %v1564
        %v1566 = vrot.slane %v1565, 2
        %v1567 = vadd.f32 %v1565, %v1566
        %v1568 = vrot.slane %v1567, 1
        %v1569 = vadd.f32 %v1567, %v1568
        %1571 = vrot.lane.b32.xlu0 %v1569, 96
        %v1572 = vpop.permute.xlu0 %1571
        %1574 = vst.msk [vmem:[%s227 + $0x1] sm:$0x1] %vm1509, %v1572
        %s1575 = sand.u32 %s114, 1
        %s1576 = scalar_lea.sflag [#allocation3], %s1575
        %s1577 = sand.u32 %s114, 1
        %s1578 = smul.addr %s1577, 64
        %s1579 = scalar_lea.vmem [#allocation2], %s1578
        %s1580 = sand.u32 %s142, 1
        %s1581 = scalar_lea.sflag [#allocation5], %s1580
        %s1582 = sand.u32 %s142, 1
        %s1583 = smul.addr %s1582, 2
        %s1584 = scalar_lea.vmem [#allocation4], %s1583
        // Predicated region
        $region33: #{tpu_custom_call.1} parent=31 // pred_check
          %p1585 = pneg %p124
        $region34: #{tpu_custom_call.1} parent=31 // pred_check_branch
          %1587 = sbr.rel (%p1585) target = $region36
        $region35: #{tpu_custom_call.1} parent=31 // pred_region
          %s1588 = smul.u32 8, %s27
          %s1590 = ssub.s32 1024, 1024
          %1591 = vsyncadd %s1576, %s1590
          %s1592 = smul.addr %s26, 32
          %s1593 = sadd.s32 %s1588, %s1592
          %s1594 = smul.addr %s1593, 128
          %s1595 = scalar_lea.hbm %s3, %s1594
          %s1596 = sshll.u32 %s1579, 4
          %s1597 = int_to_ptr.vmem [resolvable:$true] %s1596
          %1602 = dma.vmem_to_hbm [thread:$0]  %s1597, 1024, %s1595, %s1576, 128, 128, 8
        $region36: #{tpu_custom_call.1} parent=31 // pred_fallthru
          _
        // Predicated region
        $region37: #{tpu_custom_call.1} parent=31 // pred_check
          %p1603 = pneg %p152
        $region38: #{tpu_custom_call.1} parent=31 // pred_check_branch
          %1605 = sbr.rel (%p1603) target = $region40
        $region39: #{tpu_custom_call.1} parent=31 // pred_region
          %s1607 = ssub.s32 32, 32
          %1608 = vsyncadd %s1581, %s1607
          %s1609 = smul.addr %s26, 4
          %s1610 = sadd.s32 %s27, %s1609
          %s1611 = smul.addr %s1610, 32
          %s1612 = scalar_lea.hbm %s4, %s1611
          %s1614 = sshll.u32 %s1584, 4
          %s1615 = int_to_ptr.vmem [resolvable:$true] %s1614
          %1617 = dma.vmem_to_hbm [thread:$0]  %s1615, 32, %s1612, %s1581
        $region40: #{tpu_custom_call.1} parent=31 // pred_fallthru
          _
      $region32: #{tpu_custom_call.1} parent=5 // pred_fallthru
        _
      %p1618 = scmp.le.s32.totalorder 2, %s17
      // Predicated region
      $region41: #{tpu_custom_call.1} parent=5 // pred_check
        %p1619 = pneg %p1618
      $region42: #{tpu_custom_call.1} parent=5 // pred_check_branch
        %1621 = sbr.rel (%p1619) target = $region44
      $region43: #{tpu_custom_call.1} parent=5 // pred_region
        %s1622 = ssub.s32 %s17, 2
        // Predicated region
        $region45: #{tpu_custom_call.1} parent=43 // pred_check
          %p1623 = pneg %p130
        $region46: #{tpu_custom_call.1} parent=43 // pred_check_branch
          %1625 = sbr.rel (%p1623) target = $region48
        $region47: #{tpu_custom_call.1} parent=43 // pred_region
          %s1626 = sand.u32 %s115, 1
          %s1627 = scalar_lea.sflag [#allocation3], %s1626
          %s1628 = sand.u32 %s115, 1
          %s1629 = smul.addr %s1628, 64
          %s1630 = scalar_lea.vmem [#allocation2], %s1629
          %1631 = dma.done %s1627, 1024
        $region48: #{tpu_custom_call.1} parent=43 // pred_fallthru
          _
        // Predicated region
        $region49: #{tpu_custom_call.1} parent=43 // pred_check
          %p1632 = pneg %p158
        $region50: #{tpu_custom_call.1} parent=43 // pred_check_branch
          %1634 = sbr.rel (%p1632) target = $region52
        $region51: #{tpu_custom_call.1} parent=43 // pred_region
          %s1635 = sand.u32 %s143, 1
          %s1636 = scalar_lea.sflag [#allocation5], %s1635
          %s1637 = sand.u32 %s143, 1
          %s1638 = smul.addr %s1637, 2
          %s1639 = scalar_lea.vmem [#allocation4], %s1638
          %1640 = dma.done %s1636, 32
        $region52: #{tpu_custom_call.1} parent=43 // pred_fallthru
          _
      $region44: #{tpu_custom_call.1} parent=5 // pred_fallthru
        _
    $region6: #{tpu_custom_call.1} parent=1 // loop_footer
      %s21 = sadd.s32 1, %s17
    $region7: #{tpu_custom_call.1} parent=1 // loop_footer_branch
      %16 = sbr.rel target = $region3
    $region8: #{tpu_custom_call.1} parent=1 // loop_exit
      _
    %1641 = vsyncpa [#allocation3], 1
    %s1642 = scalar_lea.sflag [#allocation3], 1
    %1643 = vsyncpa %s1642, 1
    %1644 = vsyncpa [#allocation5], 1
    %s1645 = scalar_lea.sflag [#allocation5], 1
    %1646 = vsyncpa %s1645, 1

</llo_original>
